<compile_context>
chip_gen: v5e
topology: v5e:2x2
jax: 0.10.0
libtpu: 0.0.40
codegen_flags: <defaults>
</compile_context>

<pallas_src>
import functools

import jax
import jax.numpy as jnp
from jax.experimental import pallas as pl
from jax.experimental.pallas import tpu as pltpu

# ---------------- mini-BERT config (small, consistent with the module) -------
VOCAB = 64
MAX_POS = 32
TYPE_VOCAB = 2
HIDDEN = 32
HEADS = 4
HEAD_DIM = HIDDEN // HEADS
INTER = 64
LAYERS = 2
CLASS_NUM = 9
CLS_PAD = 128          # lane-dense padded classifier width
EPS = 1e-12

# ----- row layout of the packed "misc" (bias / LayerNorm) buffer -------------
ROW_EMB_G = 0
ROW_EMB_B = 1
ROWS_PER_LAYER = 7      # bo, g1, be1, b1, b2, g2, be2
ROW_CLS_B = 2 + LAYERS * ROWS_PER_LAYER
MISC_ROWS = ROW_CLS_B + 1
MISC_ROWS_PAD = 24


def _layernorm(x, gamma, beta):
    # var = E[x^2] - E[x]^2  -> both reductions issued back-to-back.
    mu = jnp.mean(x, axis=-1, keepdims=True)
    m2 = jnp.mean(x * x, axis=-1, keepdims=True)
    var = m2 - mu * mu
    return (x - mu) * jax.lax.rsqrt(var + EPS) * gamma + beta


# ------------------------------ fused Pallas kernel ---------------------------
def fused_forward_kernel(ids_ref, wemb_ref, pt_ref, wqkv_ref, bq_ref, wo_ref,
                         w1_ref, w2_ref, clsw_ref, misc_ref, out_ref, *, B, S):
    BS = B * S
    bf16 = jnp.bfloat16
    f32 = jnp.float32

    def vrow(r, w):
        # one packed bias / LN vector, shape (1, w)
        return misc_ref[r:r + 1, :w]

    # ---- embeddings: one-hot matmul on the MXU (replaces the XLA gather) ----
    ids = ids_ref[...]                                           # (BS, 1) int32
    iota_v = jax.lax.broadcasted_iota(jnp.int32, (BS, VOCAB), 1)
    onehot = (ids == iota_v).astype(bf16)                        # (BS, VOCAB)
    h = jnp.dot(onehot, wemb_ref[...], preferred_element_type=f32)
    pe = pt_ref[0:S, :]                                          # pos + type0, (S, H)
    h = h + jnp.concatenate([pe] * B, axis=0)                    # broadcast over batch
    h = _layernorm(h, vrow(ROW_EMB_G, HIDDEN), vrow(ROW_EMB_B, HIDDEN))

    scale = 1.0 / (HEAD_DIM ** 0.5)
    bmm = (((2,), (1,)), ((0,), (0,)))    # batched (b,m,k) @ (b,k,n)
    bmm_t = (((2,), (2,)), ((0,), (0,)))  # batched (b,m,k) @ (b,n,k)  (q k^T)

    for l in range(LAYERS):
        base = 2 + l * ROWS_PER_LAYER
        h_bf = h.astype(bf16)

        # -------- multi-head self-attention, heads batched on the MXU --------
        attn_rows = []
        for b in range(B):
            hb = jnp.broadcast_to(h_bf[b * S:(b + 1) * S], (HEADS, S, HIDDEN))
            qkv = jax.lax.dot_general(hb, wqkv_ref[l], dimension_numbers=bmm,
                                      preferred_element_type=f32)      # (HEADS,S,3*HD)
            q = qkv[..., 0:HEAD_DIM] + bq_ref[l]
            k = qkv[..., HEAD_DIM:2 * HEAD_DIM]        # K bias dropped (softmax invariant)
            v = qkv[..., 2 * HEAD_DIM:3 * HEAD_DIM]    # V bias folded into bo at pack time
            s = jax.lax.dot_general(q.astype(bf16), k.astype(bf16),
                                    dimension_numbers=bmm_t,
                                    preferred_element_type=f32) * scale  # (HEADS,S,S)
            s = s - jnp.max(s, axis=-1, keepdims=True)
            p = jnp.exp(s)
            p = p * pl.reciprocal(jnp.sum(p, axis=-1, keepdims=True), approx=True)
            c = jax.lax.dot_general(p.astype(bf16), v.astype(bf16),
                                    dimension_numbers=bmm,
                                    preferred_element_type=f32)          # (HEADS,S,HD)
            o = jax.lax.dot_general(c.astype(bf16), wo_ref[l],
                                    dimension_numbers=bmm,
                                    preferred_element_type=f32)          # (HEADS,S,H)
            attn_rows.append(jnp.sum(o, axis=0))                         # (S, H)
        attn = jnp.concatenate(attn_rows, axis=0) + vrow(base + 0, HIDDEN)
        h = _layernorm(h + attn, vrow(base + 1, HIDDEN), vrow(base + 2, HIDDEN))

        # ------------------------------ FFN ---------------------------------
        h_bf = h.astype(bf16)
        inter = (jnp.dot(h_bf, w1_ref[l], preferred_element_type=f32)
                 + vrow(base + 3, INTER))
        # TODO(synk): HF BERT uses exact (erf) GELU; tanh approximation kept for
        #             robust Mosaic lowering -> tiny numerical difference.
        inter = jax.nn.gelu(inter, approximate=True)
        ffn = (jnp.dot(inter.astype(bf16), w2_ref[l], preferred_element_type=f32)
               + vrow(base + 4, HIDDEN))
        h = _layernorm(h + ffn, vrow(base + 5, HIDDEN), vrow(base + 6, HIDDEN))

    # ---- classifier: lane-dense 128-wide store --------------------------------
    out_ref[...] = (jnp.dot(h.astype(bf16), clsw_ref[...], preferred_element_type=f32)
                    + vrow(ROW_CLS_B, CLS_PAD))


# ------------------------------ packing ---------------------------------------
def pack_params(params):
    """Repack per-head weights, fold biases, pad the classifier. Done once."""
    L = params["layers"]
    bf16 = jnp.bfloat16

    def head_qkv(lyr):
        cols = []
        for hh in range(HEADS):
            sl = slice(hh * HEAD_DIM, (hh + 1) * HEAD_DIM)
            cols.append(jnp.concatenate(
                [lyr["wq"][:, sl], lyr["wk"][:, sl], lyr["wv"][:, sl]], axis=1))
        return jnp.stack(cols, axis=0)                              # (HEADS, H, 3*HD)

    def head_wo(lyr):
        return jnp.stack([lyr["wo"][hh * HEAD_DIM:(hh + 1) * HEAD_DIM, :]
                          for hh in range(HEADS)], axis=0)          # (HEADS, HD, H)

    def row(v):
        v = jnp.reshape(v, (1, -1)).astype(jnp.float32)
        return jnp.pad(v, ((0, 0), (0, CLS_PAD - v.shape[1])))

    misc_rows = [row(params["emb_gamma"]), row(params["emb_beta"])]
    for lyr in L:
        # fold the V projection bias into the output-projection bias (exact)
        bo_folded = lyr["bo"] + jnp.dot(lyr["bv"], lyr["wo"])
        misc_rows += [row(bo_folded), row(lyr["g1"]), row(lyr["be1"]),
                      row(lyr["b1"]), row(lyr["b2"]), row(lyr["g2"]), row(lyr["be2"])]
    misc_rows.append(row(params["cls_b"]))
    misc = jnp.concatenate(misc_rows, axis=0)
    misc = jnp.pad(misc, ((0, MISC_ROWS_PAD - misc.shape[0]), (0, 0)))

    return {
        "word_emb": params["word_emb"].astype(bf16),
        "pos_type": (params["pos_emb"] + params["type_emb"][0:1]).astype(jnp.float32),
        "wqkv3": jnp.stack([head_qkv(lyr) for lyr in L]).astype(bf16),     # (L,HEADS,H,3HD)
        "bq3": jnp.stack([lyr["bq"].reshape(HEADS, 1, HEAD_DIM)
                          for lyr in L]).astype(jnp.float32),              # (L,HEADS,1,HD)
        "wo3": jnp.stack([head_wo(lyr) for lyr in L]).astype(bf16),        # (L,HEADS,HD,H)
        "w1": jnp.stack([lyr["w1"] for lyr in L]).astype(bf16),            # (L,H,INTER)
        "w2": jnp.stack([lyr["w2"] for lyr in L]).astype(bf16),            # (L,INTER,H)
        "cls_w": jnp.pad(params["cls_w"],
                         ((0, 0), (0, CLS_PAD - CLASS_NUM))).astype(bf16), # (H,128)
        "misc": misc,                                                      # (24,128) f32
    }


# ------------------------------ wrapper ----------------------------------------
def forward(packed, x_ids, return_padded=False):
    """TorchModel.forward(x) with target=None, use_crf=False -> logits."""
    B, S = x_ids.shape
    BS = B * S
    ids = x_ids.astype(jnp.int32).reshape(BS, 1)

    weights = [packed["word_emb"], packed["pos_type"], packed["wqkv3"], packed["bq3"],
               packed["wo3"], packed["w1"], packed["w2"], packed["cls_w"], packed["misc"]]

    in_specs = [pl.BlockSpec((BS, 1), lambda i: (0, 0))]
    in_specs += [pl.BlockSpec(w.shape, lambda i, n=w.ndim: (0,) * n) for w in weights]

    logits_pad = pl.pallas_call(
        functools.partial(fused_forward_kernel, B=B, S=S),
        out_shape=jax.ShapeDtypeStruct((BS, CLS_PAD), jnp.float32),
        grid=(1,),
        in_specs=in_specs,
        out_specs=pl.BlockSpec((BS, CLS_PAD), lambda i: (0, 0)),
        compiler_params=pltpu.CompilerParams(dimension_semantics=("arbitrary",)),
    )(ids, *weights)

    logits_pad = logits_pad.reshape(B, S, CLS_PAD)
    if return_padded:
        # Lane-dense slab; first CLASS_NUM lanes are the logits. Downstream that
        # can argmax/mask over the padded lanes should use this to skip the slice copy.
        return logits_pad
    return logits_pad[..., :CLASS_NUM]


# ------------------------------ deterministic params ---------------------------
def init_params(key):
    std = 0.02
    keys = iter(jax.random.split(key, 64))

    def dense(shape):
        return (std * jax.random.normal(next(keys), shape)).astype(jnp.float32)

    params = {
        "word_emb": dense((VOCAB, HIDDEN)),
        "pos_emb": dense((MAX_POS, HIDDEN)),
        "type_emb": dense((TYPE_VOCAB, HIDDEN)),
        "emb_gamma": jnp.ones((1, HIDDEN), jnp.float32),
        "emb_beta": jnp.zeros((1, HIDDEN), jnp.float32),
        "layers": [],
        "cls_w": dense((HIDDEN, CLASS_NUM)),
        "cls_b": jnp.zeros((1, CLASS_NUM), jnp.float32),
    }
    for _ in range(LAYERS):
        params["layers"].append({
            "wq": dense((HIDDEN, HIDDEN)), "bq": jnp.zeros((1, HIDDEN), jnp.float32),
            "wk": dense((HIDDEN, HIDDEN)), "bk": jnp.zeros((1, HIDDEN), jnp.float32),
            "wv": dense((HIDDEN, HIDDEN)), "bv": jnp.zeros((1, HIDDEN), jnp.float32),
            "wo": dense((HIDDEN, HIDDEN)), "bo": jnp.zeros((1, HIDDEN), jnp.float32),
            "g1": jnp.ones((1, HIDDEN), jnp.float32), "be1": jnp.zeros((1, HIDDEN), jnp.float32),
            "w1": dense((HIDDEN, INTER)), "b1": jnp.zeros((1, INTER), jnp.float32),
            "w2": dense((INTER, HIDDEN)), "b2": jnp.zeros((1, HIDDEN), jnp.float32),
            "g2": jnp.ones((1, HIDDEN), jnp.float32), "be2": jnp.zeros((1, HIDDEN), jnp.float32),
        })
    return params


if __name__ == "__main__":
    B, S = 2, 8
    root = jax.random.PRNGKey(0)
    pkey, xkey = jax.random.split(root)
    params = init_params(pkey)
    packed = pack_params(params)
    x_ids = jax.random.randint(xkey, (B, S), 0, VOCAB, dtype=jnp.int32)

    logits = forward(packed, x_ids)
    logits = jax.block_until_ready(logits)

    assert logits.shape == (B, S, CLASS_NUM), logits.shape
    assert logits.dtype == jnp.float32
    assert bool(jnp.all(jnp.isfinite(logits)))
    print("KERNEL_OK")
</pallas_src>

<mosaic_0001>
module attributes {stable_mosaic.version = 11 : i64} {
  func.func @fused_forward_kernel(%arg0: i32, %arg1: memref<16x1xi32, #tpu.memory_space<vmem>>, %arg2: memref<64x32xbf16, #tpu.memory_space<vmem>>, %arg3: memref<32x32xf32, #tpu.memory_space<vmem>>, %arg4: memref<2x4x32x24xbf16, #tpu.memory_space<vmem>>, %arg5: memref<2x4x1x8xf32, #tpu.memory_space<vmem>>, %arg6: memref<2x4x8x32xbf16, #tpu.memory_space<vmem>>, %arg7: memref<2x32x64xbf16, #tpu.memory_space<vmem>>, %arg8: memref<2x64x32xbf16, #tpu.memory_space<vmem>>, %arg9: memref<32x128xbf16, #tpu.memory_space<vmem>>, %arg10: memref<24x128xf32, #tpu.memory_space<vmem>>, %arg11: memref<16x128xf32, #tpu.memory_space<vmem>>) attributes {dimension_semantics = [#tpu.dimension_semantics<arbitrary>], iteration_bounds = array<i64: 1>, scalar_prefetch = 0 : i64, scratch_operands = 0 : i64, tpu.core_type = #tpu.core_type<tc>, window_params = [{pipeline_mode = #tpu.pipeline_mode<synchronous>, transform_indices = @transform_0, window_bounds = array<i64: 16, 1>}, {pipeline_mode = #tpu.pipeline_mode<synchronous>, transform_indices = @transform_1, window_bounds = array<i64: 64, 32>}, {pipeline_mode = #tpu.pipeline_mode<synchronous>, transform_indices = @transform_2, window_bounds = array<i64: 32, 32>}, {pipeline_mode = #tpu.pipeline_mode<synchronous>, transform_indices = @transform_3, window_bounds = array<i64: 2, 4, 32, 24>}, {pipeline_mode = #tpu.pipeline_mode<synchronous>, transform_indices = @transform_4, window_bounds = array<i64: 2, 4, 1, 8>}, {pipeline_mode = #tpu.pipeline_mode<synchronous>, transform_indices = @transform_5, window_bounds = array<i64: 2, 4, 8, 32>}, {pipeline_mode = #tpu.pipeline_mode<synchronous>, transform_indices = @transform_6, window_bounds = array<i64: 2, 32, 64>}, {pipeline_mode = #tpu.pipeline_mode<synchronous>, transform_indices = @transform_7, window_bounds = array<i64: 2, 64, 32>}, {pipeline_mode = #tpu.pipeline_mode<synchronous>, transform_indices = @transform_8, window_bounds = array<i64: 32, 128>}, {pipeline_mode = #tpu.pipeline_mode<synchronous>, transform_indices = @transform_9, window_bounds = array<i64: 24, 128>}, {pipeline_mode = #tpu.pipeline_mode<synchronous>, transform_indices = @transform_10, window_bounds = array<i64: 16, 128>}]} {
    %c0 = arith.constant 0 : index
    %c0_0 = arith.constant 0 : index
    %0 = vector.load %arg1[%c0, %c0_0] : memref<16x1xi32, #tpu.memory_space<vmem>>, vector<16x1xi32>
    %1 = tpu.iota {dimensions = array<i32: 1>} : vector<16x64xi32>
    %2 = vector.broadcast %0 : vector<16x1xi32> to vector<16x64xi32>
    %3 = arith.cmpi eq, %2, %1 : vector<16x64xi32>
    %4 = arith.extui %3 : vector<16x64xi1> to vector<16x64xi32>
    %5 = arith.sitofp %4 : vector<16x64xi32> to vector<16x64xf32>
    %6 = arith.truncf %5 : vector<16x64xf32> to vector<16x64xbf16>
    %c0_1 = arith.constant 0 : index
    %c0_2 = arith.constant 0 : index
    %7 = vector.load %arg2[%c0_1, %c0_2] : memref<64x32xbf16, #tpu.memory_space<vmem>>, vector<64x32xbf16>
    %cst = arith.constant dense<0.000000e+00> : vector<16x32xf32>
    %8 = tpu.matmul %6, %7, %cst {dimension_numbers = #tpu.dot_dimension_numbers<[1], [0], [0], [1], [0, 0, 1, 1], [], []>} : vector<16x64xbf16>, vector<64x32xbf16>, vector<16x32xf32> -> vector<16x32xf32>
    %c0_3 = arith.constant 0 : index
    %c0_4 = arith.constant 0 : index
    %9 = vector.load %arg3[%c0_3, %c0_4] : memref<32x32xf32, #tpu.memory_space<vmem>>, vector<8x32xf32>
    %10 = tpu.concatenate %9, %9 in 0 : vector<8x32xf32>, vector<8x32xf32> -> vector<16x32xf32>
    %11 = arith.addf %8, %10 : vector<16x32xf32>
    %c0_5 = arith.constant 0 : index
    %c0_6 = arith.constant 0 : index
    %12 = vector.load %arg10[%c0_5, %c0_6] : memref<24x128xf32, #tpu.memory_space<vmem>>, vector<1x32xf32>
    %c1 = arith.constant 1 : index
    %c0_7 = arith.constant 0 : index
    %13 = vector.load %arg10[%c1, %c0_7] : memref<24x128xf32, #tpu.memory_space<vmem>>, vector<1x32xf32>
    %cst_8 = arith.constant dense<0.000000e+00> : vector<16xf32>
    %14 = vector.multi_reduction <add>, %11, %cst_8 [1] : vector<16x32xf32> to vector<16xf32>
    %15 = vector.shape_cast %14 : vector<16xf32> to vector<16x1xf32>
    %cst_9 = arith.constant 3.200000e+01 : f32
    %16 = vector.broadcast %cst_9 : f32 to vector<16x1xf32>
    %17 = arith.divf %15, %16 : vector<16x1xf32>
    %18 = arith.mulf %11, %11 : vector<16x32xf32>
    %cst_10 = arith.constant dense<0.000000e+00> : vector<16xf32>
    %19 = vector.multi_reduction <add>, %18, %cst_10 [1] : vector<16x32xf32> to vector<16xf32>
    %20 = vector.shape_cast %19 : vector<16xf32> to vector<16x1xf32>
    %cst_11 = arith.constant 3.200000e+01 : f32
    %21 = vector.broadcast %cst_11 : f32 to vector<16x1xf32>
    %22 = arith.divf %20, %21 : vector<16x1xf32>
    %23 = arith.mulf %17, %17 : vector<16x1xf32>
    %24 = arith.subf %22, %23 : vector<16x1xf32>
    %25 = vector.broadcast %17 : vector<16x1xf32> to vector<16x32xf32>
    %26 = arith.subf %11, %25 : vector<16x32xf32>
    %cst_12 = arith.constant 9.99999996E-13 : f32
    %27 = vector.broadcast %cst_12 : f32 to vector<16x1xf32>
    %28 = arith.addf %24, %27 : vector<16x1xf32>
    %29 = math.rsqrt %28 : vector<16x1xf32>
    %30 = vector.broadcast %29 : vector<16x1xf32> to vector<16x32xf32>
    %31 = arith.mulf %26, %30 : vector<16x32xf32>
    %32 = vector.broadcast %12 : vector<1x32xf32> to vector<16x32xf32>
    %33 = arith.mulf %31, %32 : vector<16x32xf32>
    %34 = vector.broadcast %13 : vector<1x32xf32> to vector<16x32xf32>
    %35 = arith.addf %33, %34 : vector<16x32xf32>
    %36 = arith.truncf %35 : vector<16x32xf32> to vector<16x32xbf16>
    %37 = vector.extract_strided_slice %36 {offsets = [0, 0], sizes = [8, 32], strides = [1, 1]} : vector<16x32xbf16> to vector<8x32xbf16>
    %38 = vector.shape_cast %37 : vector<8x32xbf16> to vector<1x8x32xbf16>
    %39 = vector.broadcast %38 : vector<1x8x32xbf16> to vector<4x8x32xbf16>
    %c0_13 = arith.constant 0 : index
    %c0_14 = arith.constant 0 : index
    %c0_15 = arith.constant 0 : index
    %c0_16 = arith.constant 0 : index
    %40 = vector.load %arg4[%c0_13, %c0_14, %c0_15, %c0_16] : memref<2x4x32x24xbf16, #tpu.memory_space<vmem>>, vector<1x4x32x24xbf16>
    %41 = vector.shape_cast %40 : vector<1x4x32x24xbf16> to vector<4x32x24xbf16>
    %cst_17 = arith.constant dense<0.000000e+00> : vector<4x8x24xf32>
    %42 = tpu.matmul %39, %41, %cst_17 {dimension_numbers = #tpu.dot_dimension_numbers<[2], [1], [1], [2], [0, 0, 0, 1, 1, 2], [0], [0]>} : vector<4x8x32xbf16>, vector<4x32x24xbf16>, vector<4x8x24xf32> -> vector<4x8x24xf32>
    %43 = vector.extract_strided_slice %42 {offsets = [0, 0, 0], sizes = [4, 8, 8], strides = [1, 1, 1]} : vector<4x8x24xf32> to vector<4x8x8xf32>
    %c0_18 = arith.constant 0 : index
    %c0_19 = arith.constant 0 : index
    %c0_20 = arith.constant 0 : index
    %c0_21 = arith.constant 0 : index
    %44 = vector.load %arg5[%c0_18, %c0_19, %c0_20, %c0_21] : memref<2x4x1x8xf32, #tpu.memory_space<vmem>>, vector<1x4x1x8xf32>
    %45 = vector.shape_cast %44 : vector<1x4x1x8xf32> to vector<4x1x8xf32>
    %46 = vector.broadcast %45 : vector<4x1x8xf32> to vector<4x8x8xf32>
    %47 = arith.addf %43, %46 : vector<4x8x8xf32>
    %48 = vector.extract_strided_slice %42 {offsets = [0, 0, 8], sizes = [4, 8, 8], strides = [1, 1, 1]} : vector<4x8x24xf32> to vector<4x8x8xf32>
    %49 = vector.extract_strided_slice %42 {offsets = [0, 0, 16], sizes = [4, 8, 8], strides = [1, 1, 1]} : vector<4x8x24xf32> to vector<4x8x8xf32>
    %50 = arith.truncf %47 : vector<4x8x8xf32> to vector<4x8x8xbf16>
    %51 = arith.truncf %48 : vector<4x8x8xf32> to vector<4x8x8xbf16>
    %cst_22 = arith.constant dense<0.000000e+00> : vector<4x8x8xf32>
    %52 = tpu.matmul %50, %51, %cst_22 {dimension_numbers = #tpu.dot_dimension_numbers<[2], [2], [1], [1], [0, 0, 0, 1, 1, 1], [0], [0]>} : vector<4x8x8xbf16>, vector<4x8x8xbf16>, vector<4x8x8xf32> -> vector<4x8x8xf32>
    %cst_23 = arith.constant 0.353553385 : f32
    %53 = vector.broadcast %cst_23 : f32 to vector<4x8x8xf32>
    %54 = arith.mulf %52, %53 : vector<4x8x8xf32>
    %cst_24 = arith.constant dense<0xFF800000> : vector<4x8xf32>
    %55 = vector.multi_reduction <maximumf>, %54, %cst_24 [2] : vector<4x8x8xf32> to vector<4x8xf32>
    %56 = vector.shape_cast %55 : vector<4x8xf32> to vector<4x8x1xf32>
    %57 = vector.broadcast %56 : vector<4x8x1xf32> to vector<4x8x8xf32>
    %58 = arith.subf %54, %57 : vector<4x8x8xf32>
    %59 = math.exp %58 : vector<4x8x8xf32>
    %cst_25 = arith.constant dense<0.000000e+00> : vector<4x8xf32>
    %60 = vector.multi_reduction <add>, %59, %cst_25 [2] : vector<4x8x8xf32> to vector<4x8xf32>
    %61 = vector.shape_cast %60 : vector<4x8xf32> to vector<4x8x1xf32>
    %62 = tpu.reciprocal %61 {approx = true} : vector<4x8x1xf32> -> vector<4x8x1xf32>
    %63 = vector.broadcast %62 : vector<4x8x1xf32> to vector<4x8x8xf32>
    %64 = arith.mulf %59, %63 : vector<4x8x8xf32>
    %65 = arith.truncf %64 : vector<4x8x8xf32> to vector<4x8x8xbf16>
    %66 = arith.truncf %49 : vector<4x8x8xf32> to vector<4x8x8xbf16>
    %cst_26 = arith.constant dense<0.000000e+00> : vector<4x8x8xf32>
    %67 = tpu.matmul %65, %66, %cst_26 {dimension_numbers = #tpu.dot_dimension_numbers<[2], [1], [1], [2], [0, 0, 0, 1, 1, 2], [0], [0]>} : vector<4x8x8xbf16>, vector<4x8x8xbf16>, vector<4x8x8xf32> -> vector<4x8x8xf32>
    %68 = arith.truncf %67 : vector<4x8x8xf32> to vector<4x8x8xbf16>
    %c0_27 = arith.constant 0 : index
    %c0_28 = arith.constant 0 : index
    %c0_29 = arith.constant 0 : index
    %c0_30 = arith.constant 0 : index
    %69 = vector.load %arg6[%c0_27, %c0_28, %c0_29, %c0_30] : memref<2x4x8x32xbf16, #tpu.memory_space<vmem>>, vector<1x4x8x32xbf16>
    %70 = vector.shape_cast %69 : vector<1x4x8x32xbf16> to vector<4x8x32xbf16>
    %cst_31 = arith.constant dense<0.000000e+00> : vector<4x8x32xf32>
    %71 = tpu.matmul %68, %70, %cst_31 {dimension_numbers = #tpu.dot_dimension_numbers<[2], [1], [1], [2], [0, 0, 0, 1, 1, 2], [0], [0]>} : vector<4x8x8xbf16>, vector<4x8x32xbf16>, vector<4x8x32xf32> -> vector<4x8x32xf32>
    %cst_32 = arith.constant dense<0.000000e+00> : vector<8x32xf32>
    %72 = vector.multi_reduction <add>, %71, %cst_32 [0] : vector<4x8x32xf32> to vector<8x32xf32>
    %73 = vector.extract_strided_slice %36 {offsets = [8, 0], sizes = [8, 32], strides = [1, 1]} : vector<16x32xbf16> to vector<8x32xbf16>
    %74 = vector.shape_cast %73 : vector<8x32xbf16> to vector<1x8x32xbf16>
    %75 = vector.broadcast %74 : vector<1x8x32xbf16> to vector<4x8x32xbf16>
    %c0_33 = arith.constant 0 : index
    %c0_34 = arith.constant 0 : index
    %c0_35 = arith.constant 0 : index
    %c0_36 = arith.constant 0 : index
    %76 = vector.load %arg4[%c0_33, %c0_34, %c0_35, %c0_36] : memref<2x4x32x24xbf16, #tpu.memory_space<vmem>>, vector<1x4x32x24xbf16>
    %77 = vector.shape_cast %76 : vector<1x4x32x24xbf16> to vector<4x32x24xbf16>
    %cst_37 = arith.constant dense<0.000000e+00> : vector<4x8x24xf32>
    %78 = tpu.matmul %75, %77, %cst_37 {dimension_numbers = #tpu.dot_dimension_numbers<[2], [1], [1], [2], [0, 0, 0, 1, 1, 2], [0], [0]>} : vector<4x8x32xbf16>, vector<4x32x24xbf16>, vector<4x8x24xf32> -> vector<4x8x24xf32>
    %79 = vector.extract_strided_slice %78 {offsets = [0, 0, 0], sizes = [4, 8, 8], strides = [1, 1, 1]} : vector<4x8x24xf32> to vector<4x8x8xf32>
    %c0_38 = arith.constant 0 : index
    %c0_39 = arith.constant 0 : index
    %c0_40 = arith.constant 0 : index
    %c0_41 = arith.constant 0 : index
    %80 = vector.load %arg5[%c0_38, %c0_39, %c0_40, %c0_41] : memref<2x4x1x8xf32, #tpu.memory_space<vmem>>, vector<1x4x1x8xf32>
    %81 = vector.shape_cast %80 : vector<1x4x1x8xf32> to vector<4x1x8xf32>
    %82 = vector.broadcast %81 : vector<4x1x8xf32> to vector<4x8x8xf32>
    %83 = arith.addf %79, %82 : vector<4x8x8xf32>
    %84 = vector.extract_strided_slice %78 {offsets = [0, 0, 8], sizes = [4, 8, 8], strides = [1, 1, 1]} : vector<4x8x24xf32> to vector<4x8x8xf32>
    %85 = vector.extract_strided_slice %78 {offsets = [0, 0, 16], sizes = [4, 8, 8], strides = [1, 1, 1]} : vector<4x8x24xf32> to vector<4x8x8xf32>
    %86 = arith.truncf %83 : vector<4x8x8xf32> to vector<4x8x8xbf16>
    %87 = arith.truncf %84 : vector<4x8x8xf32> to vector<4x8x8xbf16>
    %cst_42 = arith.constant dense<0.000000e+00> : vector<4x8x8xf32>
    %88 = tpu.matmul %86, %87, %cst_42 {dimension_numbers = #tpu.dot_dimension_numbers<[2], [2], [1], [1], [0, 0, 0, 1, 1, 1], [0], [0]>} : vector<4x8x8xbf16>, vector<4x8x8xbf16>, vector<4x8x8xf32> -> vector<4x8x8xf32>
    %cst_43 = arith.constant 0.353553385 : f32
    %89 = vector.broadcast %cst_43 : f32 to vector<4x8x8xf32>
    %90 = arith.mulf %88, %89 : vector<4x8x8xf32>
    %cst_44 = arith.constant dense<0xFF800000> : vector<4x8xf32>
    %91 = vector.multi_reduction <maximumf>, %90, %cst_44 [2] : vector<4x8x8xf32> to vector<4x8xf32>
    %92 = vector.shape_cast %91 : vector<4x8xf32> to vector<4x8x1xf32>
    %93 = vector.broadcast %92 : vector<4x8x1xf32> to vector<4x8x8xf32>
    %94 = arith.subf %90, %93 : vector<4x8x8xf32>
    %95 = math.exp %94 : vector<4x8x8xf32>
    %cst_45 = arith.constant dense<0.000000e+00> : vector<4x8xf32>
    %96 = vector.multi_reduction <add>, %95, %cst_45 [2] : vector<4x8x8xf32> to vector<4x8xf32>
    %97 = vector.shape_cast %96 : vector<4x8xf32> to vector<4x8x1xf32>
    %98 = tpu.reciprocal %97 {approx = true} : vector<4x8x1xf32> -> vector<4x8x1xf32>
    %99 = vector.broadcast %98 : vector<4x8x1xf32> to vector<4x8x8xf32>
    %100 = arith.mulf %95, %99 : vector<4x8x8xf32>
    %101 = arith.truncf %100 : vector<4x8x8xf32> to vector<4x8x8xbf16>
    %102 = arith.truncf %85 : vector<4x8x8xf32> to vector<4x8x8xbf16>
    %cst_46 = arith.constant dense<0.000000e+00> : vector<4x8x8xf32>
    %103 = tpu.matmul %101, %102, %cst_46 {dimension_numbers = #tpu.dot_dimension_numbers<[2], [1], [1], [2], [0, 0, 0, 1, 1, 2], [0], [0]>} : vector<4x8x8xbf16>, vector<4x8x8xbf16>, vector<4x8x8xf32> -> vector<4x8x8xf32>
    %104 = arith.truncf %103 : vector<4x8x8xf32> to vector<4x8x8xbf16>
    %c0_47 = arith.constant 0 : index
    %c0_48 = arith.constant 0 : index
    %c0_49 = arith.constant 0 : index
    %c0_50 = arith.constant 0 : index
    %105 = vector.load %arg6[%c0_47, %c0_48, %c0_49, %c0_50] : memref<2x4x8x32xbf16, #tpu.memory_space<vmem>>, vector<1x4x8x32xbf16>
    %106 = vector.shape_cast %105 : vector<1x4x8x32xbf16> to vector<4x8x32xbf16>
    %cst_51 = arith.constant dense<0.000000e+00> : vector<4x8x32xf32>
    %107 = tpu.matmul %104, %106, %cst_51 {dimension_numbers = #tpu.dot_dimension_numbers<[2], [1], [1], [2], [0, 0, 0, 1, 1, 2], [0], [0]>} : vector<4x8x8xbf16>, vector<4x8x32xbf16>, vector<4x8x32xf32> -> vector<4x8x32xf32>
    %cst_52 = arith.constant dense<0.000000e+00> : vector<8x32xf32>
    %108 = vector.multi_reduction <add>, %107, %cst_52 [0] : vector<4x8x32xf32> to vector<8x32xf32>
    %109 = tpu.concatenate %72, %108 in 0 : vector<8x32xf32>, vector<8x32xf32> -> vector<16x32xf32>
    %c2 = arith.constant 2 : index
    %c0_53 = arith.constant 0 : index
    %110 = vector.load %arg10[%c2, %c0_53] : memref<24x128xf32, #tpu.memory_space<vmem>>, vector<1x32xf32>
    %111 = vector.broadcast %110 : vector<1x32xf32> to vector<16x32xf32>
    %112 = arith.addf %109, %111 : vector<16x32xf32>
    %113 = arith.addf %35, %112 : vector<16x32xf32>
    %c3 = arith.constant 3 : index
    %c0_54 = arith.constant 0 : index
    %114 = vector.load %arg10[%c3, %c0_54] : memref<24x128xf32, #tpu.memory_space<vmem>>, vector<1x32xf32>
    %c4 = arith.constant 4 : index
    %c0_55 = arith.constant 0 : index
    %115 = vector.load %arg10[%c4, %c0_55] : memref<24x128xf32, #tpu.memory_space<vmem>>, vector<1x32xf32>
    %cst_56 = arith.constant dense<0.000000e+00> : vector<16xf32>
    %116 = vector.multi_reduction <add>, %113, %cst_56 [1] : vector<16x32xf32> to vector<16xf32>
    %117 = vector.shape_cast %116 : vector<16xf32> to vector<16x1xf32>
    %cst_57 = arith.constant 3.200000e+01 : f32
    %118 = vector.broadcast %cst_57 : f32 to vector<16x1xf32>
    %119 = arith.divf %117, %118 : vector<16x1xf32>
    %120 = arith.mulf %113, %113 : vector<16x32xf32>
    %cst_58 = arith.constant dense<0.000000e+00> : vector<16xf32>
    %121 = vector.multi_reduction <add>, %120, %cst_58 [1] : vector<16x32xf32> to vector<16xf32>
    %122 = vector.shape_cast %121 : vector<16xf32> to vector<16x1xf32>
    %cst_59 = arith.constant 3.200000e+01 : f32
    %123 = vector.broadcast %cst_59 : f32 to vector<16x1xf32>
    %124 = arith.divf %122, %123 : vector<16x1xf32>
    %125 = arith.mulf %119, %119 : vector<16x1xf32>
    %126 = arith.subf %124, %125 : vector<16x1xf32>
    %127 = vector.broadcast %119 : vector<16x1xf32> to vector<16x32xf32>
    %128 = arith.subf %113, %127 : vector<16x32xf32>
    %cst_60 = arith.constant 9.99999996E-13 : f32
    %129 = vector.broadcast %cst_60 : f32 to vector<16x1xf32>
    %130 = arith.addf %126, %129 : vector<16x1xf32>
    %131 = math.rsqrt %130 : vector<16x1xf32>
    %132 = vector.broadcast %131 : vector<16x1xf32> to vector<16x32xf32>
    %133 = arith.mulf %128, %132 : vector<16x32xf32>
    %134 = vector.broadcast %114 : vector<1x32xf32> to vector<16x32xf32>
    %135 = arith.mulf %133, %134 : vector<16x32xf32>
    %136 = vector.broadcast %115 : vector<1x32xf32> to vector<16x32xf32>
    %137 = arith.addf %135, %136 : vector<16x32xf32>
    %138 = arith.truncf %137 : vector<16x32xf32> to vector<16x32xbf16>
    %c0_61 = arith.constant 0 : index
    %c0_62 = arith.constant 0 : index
    %c0_63 = arith.constant 0 : index
    %139 = vector.load %arg7[%c0_61, %c0_62, %c0_63] : memref<2x32x64xbf16, #tpu.memory_space<vmem>>, vector<1x32x64xbf16>
    %140 = vector.shape_cast %139 : vector<1x32x64xbf16> to vector<32x64xbf16>
    %cst_64 = arith.constant dense<0.000000e+00> : vector<16x64xf32>
    %141 = tpu.matmul %138, %140, %cst_64 {dimension_numbers = #tpu.dot_dimension_numbers<[1], [0], [0], [1], [0, 0, 1, 1], [], []>} : vector<16x32xbf16>, vector<32x64xbf16>, vector<16x64xf32> -> vector<16x64xf32>
    %c5 = arith.constant 5 : index
    %c0_65 = arith.constant 0 : index
    %142 = vector.load %arg10[%c5, %c0_65] : memref<24x128xf32, #tpu.memory_space<vmem>>, vector<1x64xf32>
    %143 = vector.broadcast %142 : vector<1x64xf32> to vector<16x64xf32>
    %144 = arith.addf %141, %143 : vector<16x64xf32>
    %145 = arith.mulf %144, %144 : vector<16x64xf32>
    %146 = arith.mulf %144, %145 : vector<16x64xf32>
    %cst_66 = arith.constant 4.471500e-02 : f32
    %147 = vector.broadcast %cst_66 : f32 to vector<16x64xf32>
    %148 = arith.mulf %147, %146 : vector<16x64xf32>
    %149 = arith.addf %144, %148 : vector<16x64xf32>
    %cst_67 = arith.constant 0.797884583 : f32
    %150 = vector.broadcast %cst_67 : f32 to vector<16x64xf32>
    %151 = arith.mulf %150, %149 : vector<16x64xf32>
    %152 = math.tanh %151 : vector<16x64xf32>
    %cst_68 = arith.constant 1.000000e+00 : f32
    %153 = vector.broadcast %cst_68 : f32 to vector<16x64xf32>
    %154 = arith.addf %153, %152 : vector<16x64xf32>
    %cst_69 = arith.constant 5.000000e-01 : f32
    %155 = vector.broadcast %cst_69 : f32 to vector<16x64xf32>
    %156 = arith.mulf %155, %154 : vector<16x64xf32>
    %157 = arith.mulf %144, %156 : vector<16x64xf32>
    %158 = arith.truncf %157 : vector<16x64xf32> to vector<16x64xbf16>
    %c0_70 = arith.constant 0 : index
    %c0_71 = arith.constant 0 : index
    %c0_72 = arith.constant 0 : index
    %159 = vector.load %arg8[%c0_70, %c0_71, %c0_72] : memref<2x64x32xbf16, #tpu.memory_space<vmem>>, vector<1x64x32xbf16>
    %160 = vector.shape_cast %159 : vector<1x64x32xbf16> to vector<64x32xbf16>
    %cst_73 = arith.constant dense<0.000000e+00> : vector<16x32xf32>
    %161 = tpu.matmul %158, %160, %cst_73 {dimension_numbers = #tpu.dot_dimension_numbers<[1], [0], [0], [1], [0, 0, 1, 1], [], []>} : vector<16x64xbf16>, vector<64x32xbf16>, vector<16x32xf32> -> vector<16x32xf32>
    %c6 = arith.constant 6 : index
    %c0_74 = arith.constant 0 : index
    %162 = vector.load %arg10[%c6, %c0_74] : memref<24x128xf32, #tpu.memory_space<vmem>>, vector<1x32xf32>
    %163 = vector.broadcast %162 : vector<1x32xf32> to vector<16x32xf32>
    %164 = arith.addf %161, %163 : vector<16x32xf32>
    %165 = arith.addf %137, %164 : vector<16x32xf32>
    %c7 = arith.constant 7 : index
    %c0_75 = arith.constant 0 : index
    %166 = vector.load %arg10[%c7, %c0_75] : memref<24x128xf32, #tpu.memory_space<vmem>>, vector<1x32xf32>
    %c8 = arith.constant 8 : index
    %c0_76 = arith.constant 0 : index
    %167 = vector.load %arg10[%c8, %c0_76] : memref<24x128xf32, #tpu.memory_space<vmem>>, vector<1x32xf32>
    %cst_77 = arith.constant dense<0.000000e+00> : vector<16xf32>
    %168 = vector.multi_reduction <add>, %165, %cst_77 [1] : vector<16x32xf32> to vector<16xf32>
    %169 = vector.shape_cast %168 : vector<16xf32> to vector<16x1xf32>
    %cst_78 = arith.constant 3.200000e+01 : f32
    %170 = vector.broadcast %cst_78 : f32 to vector<16x1xf32>
    %171 = arith.divf %169, %170 : vector<16x1xf32>
    %172 = arith.mulf %165, %165 : vector<16x32xf32>
    %cst_79 = arith.constant dense<0.000000e+00> : vector<16xf32>
    %173 = vector.multi_reduction <add>, %172, %cst_79 [1] : vector<16x32xf32> to vector<16xf32>
    %174 = vector.shape_cast %173 : vector<16xf32> to vector<16x1xf32>
    %cst_80 = arith.constant 3.200000e+01 : f32
    %175 = vector.broadcast %cst_80 : f32 to vector<16x1xf32>
    %176 = arith.divf %174, %175 : vector<16x1xf32>
    %177 = arith.mulf %171, %171 : vector<16x1xf32>
    %178 = arith.subf %176, %177 : vector<16x1xf32>
    %179 = vector.broadcast %171 : vector<16x1xf32> to vector<16x32xf32>
    %180 = arith.subf %165, %179 : vector<16x32xf32>
    %cst_81 = arith.constant 9.99999996E-13 : f32
    %181 = vector.broadcast %cst_81 : f32 to vector<16x1xf32>
    %182 = arith.addf %178, %181 : vector<16x1xf32>
    %183 = math.rsqrt %182 : vector<16x1xf32>
    %184 = vector.broadcast %183 : vector<16x1xf32> to vector<16x32xf32>
    %185 = arith.mulf %180, %184 : vector<16x32xf32>
    %186 = vector.broadcast %166 : vector<1x32xf32> to vector<16x32xf32>
    %187 = arith.mulf %185, %186 : vector<16x32xf32>
    %188 = vector.broadcast %167 : vector<1x32xf32> to vector<16x32xf32>
    %189 = arith.addf %187, %188 : vector<16x32xf32>
    %190 = arith.truncf %189 : vector<16x32xf32> to vector<16x32xbf16>
    %191 = vector.extract_strided_slice %190 {offsets = [0, 0], sizes = [8, 32], strides = [1, 1]} : vector<16x32xbf16> to vector<8x32xbf16>
    %192 = vector.shape_cast %191 : vector<8x32xbf16> to vector<1x8x32xbf16>
    %193 = vector.broadcast %192 : vector<1x8x32xbf16> to vector<4x8x32xbf16>
    %c1_82 = arith.constant 1 : index
    %c0_83 = arith.constant 0 : index
    %c0_84 = arith.constant 0 : index
    %c0_85 = arith.constant 0 : index
    %194 = vector.load %arg4[%c1_82, %c0_83, %c0_84, %c0_85] : memref<2x4x32x24xbf16, #tpu.memory_space<vmem>>, vector<1x4x32x24xbf16>
    %195 = vector.shape_cast %194 : vector<1x4x32x24xbf16> to vector<4x32x24xbf16>
    %cst_86 = arith.constant dense<0.000000e+00> : vector<4x8x24xf32>
    %196 = tpu.matmul %193, %195, %cst_86 {dimension_numbers = #tpu.dot_dimension_numbers<[2], [1], [1], [2], [0, 0, 0, 1, 1, 2], [0], [0]>} : vector<4x8x32xbf16>, vector<4x32x24xbf16>, vector<4x8x24xf32> -> vector<4x8x24xf32>
    %197 = vector.extract_strided_slice %196 {offsets = [0, 0, 0], sizes = [4, 8, 8], strides = [1, 1, 1]} : vector<4x8x24xf32> to vector<4x8x8xf32>
    %c1_87 = arith.constant 1 : index
    %c0_88 = arith.constant 0 : index
    %c0_89 = arith.constant 0 : index
    %c0_90 = arith.constant 0 : index
    %198 = vector.load %arg5[%c1_87, %c0_88, %c0_89, %c0_90] : memref<2x4x1x8xf32, #tpu.memory_space<vmem>>, vector<1x4x1x8xf32>
    %199 = vector.shape_cast %198 : vector<1x4x1x8xf32> to vector<4x1x8xf32>
    %200 = vector.broadcast %199 : vector<4x1x8xf32> to vector<4x8x8xf32>
    %201 = arith.addf %197, %200 : vector<4x8x8xf32>
    %202 = vector.extract_strided_slice %196 {offsets = [0, 0, 8], sizes = [4, 8, 8], strides = [1, 1, 1]} : vector<4x8x24xf32> to vector<4x8x8xf32>
    %203 = vector.extract_strided_slice %196 {offsets = [0, 0, 16], sizes = [4, 8, 8], strides = [1, 1, 1]} : vector<4x8x24xf32> to vector<4x8x8xf32>
    %204 = arith.truncf %201 : vector<4x8x8xf32> to vector<4x8x8xbf16>
    %205 = arith.truncf %202 : vector<4x8x8xf32> to vector<4x8x8xbf16>
    %cst_91 = arith.constant dense<0.000000e+00> : vector<4x8x8xf32>
    %206 = tpu.matmul %204, %205, %cst_91 {dimension_numbers = #tpu.dot_dimension_numbers<[2], [2], [1], [1], [0, 0, 0, 1, 1, 1], [0], [0]>} : vector<4x8x8xbf16>, vector<4x8x8xbf16>, vector<4x8x8xf32> -> vector<4x8x8xf32>
    %cst_92 = arith.constant 0.353553385 : f32
    %207 = vector.broadcast %cst_92 : f32 to vector<4x8x8xf32>
    %208 = arith.mulf %206, %207 : vector<4x8x8xf32>
    %cst_93 = arith.constant dense<0xFF800000> : vector<4x8xf32>
    %209 = vector.multi_reduction <maximumf>, %208, %cst_93 [2] : vector<4x8x8xf32> to vector<4x8xf32>
    %210 = vector.shape_cast %209 : vector<4x8xf32> to vector<4x8x1xf32>
    %211 = vector.broadcast %210 : vector<4x8x1xf32> to vector<4x8x8xf32>
    %212 = arith.subf %208, %211 : vector<4x8x8xf32>
    %213 = math.exp %212 : vector<4x8x8xf32>
    %cst_94 = arith.constant dense<0.000000e+00> : vector<4x8xf32>
    %214 = vector.multi_reduction <add>, %213, %cst_94 [2] : vector<4x8x8xf32> to vector<4x8xf32>
    %215 = vector.shape_cast %214 : vector<4x8xf32> to vector<4x8x1xf32>
    %216 = tpu.reciprocal %215 {approx = true} : vector<4x8x1xf32> -> vector<4x8x1xf32>
    %217 = vector.broadcast %216 : vector<4x8x1xf32> to vector<4x8x8xf32>
    %218 = arith.mulf %213, %217 : vector<4x8x8xf32>
    %219 = arith.truncf %218 : vector<4x8x8xf32> to vector<4x8x8xbf16>
    %220 = arith.truncf %203 : vector<4x8x8xf32> to vector<4x8x8xbf16>
    %cst_95 = arith.constant dense<0.000000e+00> : vector<4x8x8xf32>
    %221 = tpu.matmul %219, %220, %cst_95 {dimension_numbers = #tpu.dot_dimension_numbers<[2], [1], [1], [2], [0, 0, 0, 1, 1, 2], [0], [0]>} : vector<4x8x8xbf16>, vector<4x8x8xbf16>, vector<4x8x8xf32> -> vector<4x8x8xf32>
    %222 = arith.truncf %221 : vector<4x8x8xf32> to vector<4x8x8xbf16>
    %c1_96 = arith.constant 1 : index
    %c0_97 = arith.constant 0 : index
    %c0_98 = arith.constant 0 : index
    %c0_99 = arith.constant 0 : index
    %223 = vector.load %arg6[%c1_96, %c0_97, %c0_98, %c0_99] : memref<2x4x8x32xbf16, #tpu.memory_space<vmem>>, vector<1x4x8x32xbf16>
    %224 = vector.shape_cast %223 : vector<1x4x8x32xbf16> to vector<4x8x32xbf16>
    %cst_100 = arith.constant dense<0.000000e+00> : vector<4x8x32xf32>
    %225 = tpu.matmul %222, %224, %cst_100 {dimension_numbers = #tpu.dot_dimension_numbers<[2], [1], [1], [2], [0, 0, 0, 1, 1, 2], [0], [0]>} : vector<4x8x8xbf16>, vector<4x8x32xbf16>, vector<4x8x32xf32> -> vector<4x8x32xf32>
    %cst_101 = arith.constant dense<0.000000e+00> : vector<8x32xf32>
    %226 = vector.multi_reduction <add>, %225, %cst_101 [0] : vector<4x8x32xf32> to vector<8x32xf32>
    %227 = vector.extract_strided_slice %190 {offsets = [8, 0], sizes = [8, 32], strides = [1, 1]} : vector<16x32xbf16> to vector<8x32xbf16>
    %228 = vector.shape_cast %227 : vector<8x32xbf16> to vector<1x8x32xbf16>
    %229 = vector.broadcast %228 : vector<1x8x32xbf16> to vector<4x8x32xbf16>
    %c1_102 = arith.constant 1 : index
    %c0_103 = arith.constant 0 : index
    %c0_104 = arith.constant 0 : index
    %c0_105 = arith.constant 0 : index
    %230 = vector.load %arg4[%c1_102, %c0_103, %c0_104, %c0_105] : memref<2x4x32x24xbf16, #tpu.memory_space<vmem>>, vector<1x4x32x24xbf16>
    %231 = vector.shape_cast %230 : vector<1x4x32x24xbf16> to vector<4x32x24xbf16>
    %cst_106 = arith.constant dense<0.000000e+00> : vector<4x8x24xf32>
    %232 = tpu.matmul %229, %231, %cst_106 {dimension_numbers = #tpu.dot_dimension_numbers<[2], [1], [1], [2], [0, 0, 0, 1, 1, 2], [0], [0]>} : vector<4x8x32xbf16>, vector<4x32x24xbf16>, vector<4x8x24xf32> -> vector<4x8x24xf32>
    %233 = vector.extract_strided_slice %232 {offsets = [0, 0, 0], sizes = [4, 8, 8], strides = [1, 1, 1]} : vector<4x8x24xf32> to vector<4x8x8xf32>
    %c1_107 = arith.constant 1 : index
    %c0_108 = arith.constant 0 : index
    %c0_109 = arith.constant 0 : index
    %c0_110 = arith.constant 0 : index
    %234 = vector.load %arg5[%c1_107, %c0_108, %c0_109, %c0_110] : memref<2x4x1x8xf32, #tpu.memory_space<vmem>>, vector<1x4x1x8xf32>
    %235 = vector.shape_cast %234 : vector<1x4x1x8xf32> to vector<4x1x8xf32>
    %236 = vector.broadcast %235 : vector<4x1x8xf32> to vector<4x8x8xf32>
    %237 = arith.addf %233, %236 : vector<4x8x8xf32>
    %238 = vector.extract_strided_slice %232 {offsets = [0, 0, 8], sizes = [4, 8, 8], strides = [1, 1, 1]} : vector<4x8x24xf32> to vector<4x8x8xf32>
    %239 = vector.extract_strided_slice %232 {offsets = [0, 0, 16], sizes = [4, 8, 8], strides = [1, 1, 1]} : vector<4x8x24xf32> to vector<4x8x8xf32>
    %240 = arith.truncf %237 : vector<4x8x8xf32> to vector<4x8x8xbf16>
    %241 = arith.truncf %238 : vector<4x8x8xf32> to vector<4x8x8xbf16>
    %cst_111 = arith.constant dense<0.000000e+00> : vector<4x8x8xf32>
    %242 = tpu.matmul %240, %241, %cst_111 {dimension_numbers = #tpu.dot_dimension_numbers<[2], [2], [1], [1], [0, 0, 0, 1, 1, 1], [0], [0]>} : vector<4x8x8xbf16>, vector<4x8x8xbf16>, vector<4x8x8xf32> -> vector<4x8x8xf32>
    %cst_112 = arith.constant 0.353553385 : f32
    %243 = vector.broadcast %cst_112 : f32 to vector<4x8x8xf32>
    %244 = arith.mulf %242, %243 : vector<4x8x8xf32>
    %cst_113 = arith.constant dense<0xFF800000> : vector<4x8xf32>
    %245 = vector.multi_reduction <maximumf>, %244, %cst_113 [2] : vector<4x8x8xf32> to vector<4x8xf32>
    %246 = vector.shape_cast %245 : vector<4x8xf32> to vector<4x8x1xf32>
    %247 = vector.broadcast %246 : vector<4x8x1xf32> to vector<4x8x8xf32>
    %248 = arith.subf %244, %247 : vector<4x8x8xf32>
    %249 = math.exp %248 : vector<4x8x8xf32>
    %cst_114 = arith.constant dense<0.000000e+00> : vector<4x8xf32>
    %250 = vector.multi_reduction <add>, %249, %cst_114 [2] : vector<4x8x8xf32> to vector<4x8xf32>
    %251 = vector.shape_cast %250 : vector<4x8xf32> to vector<4x8x1xf32>
    %252 = tpu.reciprocal %251 {approx = true} : vector<4x8x1xf32> -> vector<4x8x1xf32>
    %253 = vector.broadcast %252 : vector<4x8x1xf32> to vector<4x8x8xf32>
    %254 = arith.mulf %249, %253 : vector<4x8x8xf32>
    %255 = arith.truncf %254 : vector<4x8x8xf32> to vector<4x8x8xbf16>
    %256 = arith.truncf %239 : vector<4x8x8xf32> to vector<4x8x8xbf16>
    %cst_115 = arith.constant dense<0.000000e+00> : vector<4x8x8xf32>
    %257 = tpu.matmul %255, %256, %cst_115 {dimension_numbers = #tpu.dot_dimension_numbers<[2], [1], [1], [2], [0, 0, 0, 1, 1, 2], [0], [0]>} : vector<4x8x8xbf16>, vector<4x8x8xbf16>, vector<4x8x8xf32> -> vector<4x8x8xf32>
    %258 = arith.truncf %257 : vector<4x8x8xf32> to vector<4x8x8xbf16>
    %c1_116 = arith.constant 1 : index
    %c0_117 = arith.constant 0 : index
    %c0_118 = arith.constant 0 : index
    %c0_119 = arith.constant 0 : index
    %259 = vector.load %arg6[%c1_116, %c0_117, %c0_118, %c0_119] : memref<2x4x8x32xbf16, #tpu.memory_space<vmem>>, vector<1x4x8x32xbf16>
    %260 = vector.shape_cast %259 : vector<1x4x8x32xbf16> to vector<4x8x32xbf16>
    %cst_120 = arith.constant dense<0.000000e+00> : vector<4x8x32xf32>
    %261 = tpu.matmul %258, %260, %cst_120 {dimension_numbers = #tpu.dot_dimension_numbers<[2], [1], [1], [2], [0, 0, 0, 1, 1, 2], [0], [0]>} : vector<4x8x8xbf16>, vector<4x8x32xbf16>, vector<4x8x32xf32> -> vector<4x8x32xf32>
    %cst_121 = arith.constant dense<0.000000e+00> : vector<8x32xf32>
    %262 = vector.multi_reduction <add>, %261, %cst_121 [0] : vector<4x8x32xf32> to vector<8x32xf32>
    %263 = tpu.concatenate %226, %262 in 0 : vector<8x32xf32>, vector<8x32xf32> -> vector<16x32xf32>
    %c9 = arith.constant 9 : index
    %c0_122 = arith.constant 0 : index
    %264 = vector.load %arg10[%c9, %c0_122] : memref<24x128xf32, #tpu.memory_space<vmem>>, vector<1x32xf32>
    %265 = vector.broadcast %264 : vector<1x32xf32> to vector<16x32xf32>
    %266 = arith.addf %263, %265 : vector<16x32xf32>
    %267 = arith.addf %189, %266 : vector<16x32xf32>
    %c10 = arith.constant 10 : index
    %c0_123 = arith.constant 0 : index
    %268 = vector.load %arg10[%c10, %c0_123] : memref<24x128xf32, #tpu.memory_space<vmem>>, vector<1x32xf32>
    %c11 = arith.constant 11 : index
    %c0_124 = arith.constant 0 : index
    %269 = vector.load %arg10[%c11, %c0_124] : memref<24x128xf32, #tpu.memory_space<vmem>>, vector<1x32xf32>
    %cst_125 = arith.constant dense<0.000000e+00> : vector<16xf32>
    %270 = vector.multi_reduction <add>, %267, %cst_125 [1] : vector<16x32xf32> to vector<16xf32>
    %271 = vector.shape_cast %270 : vector<16xf32> to vector<16x1xf32>
    %cst_126 = arith.constant 3.200000e+01 : f32
    %272 = vector.broadcast %cst_126 : f32 to vector<16x1xf32>
    %273 = arith.divf %271, %272 : vector<16x1xf32>
    %274 = arith.mulf %267, %267 : vector<16x32xf32>
    %cst_127 = arith.constant dense<0.000000e+00> : vector<16xf32>
    %275 = vector.multi_reduction <add>, %274, %cst_127 [1] : vector<16x32xf32> to vector<16xf32>
    %276 = vector.shape_cast %275 : vector<16xf32> to vector<16x1xf32>
    %cst_128 = arith.constant 3.200000e+01 : f32
    %277 = vector.broadcast %cst_128 : f32 to vector<16x1xf32>
    %278 = arith.divf %276, %277 : vector<16x1xf32>
    %279 = arith.mulf %273, %273 : vector<16x1xf32>
    %280 = arith.subf %278, %279 : vector<16x1xf32>
    %281 = vector.broadcast %273 : vector<16x1xf32> to vector<16x32xf32>
    %282 = arith.subf %267, %281 : vector<16x32xf32>
    %cst_129 = arith.constant 9.99999996E-13 : f32
    %283 = vector.broadcast %cst_129 : f32 to vector<16x1xf32>
    %284 = arith.addf %280, %283 : vector<16x1xf32>
    %285 = math.rsqrt %284 : vector<16x1xf32>
    %286 = vector.broadcast %285 : vector<16x1xf32> to vector<16x32xf32>
    %287 = arith.mulf %282, %286 : vector<16x32xf32>
    %288 = vector.broadcast %268 : vector<1x32xf32> to vector<16x32xf32>
    %289 = arith.mulf %287, %288 : vector<16x32xf32>
    %290 = vector.broadcast %269 : vector<1x32xf32> to vector<16x32xf32>
    %291 = arith.addf %289, %290 : vector<16x32xf32>
    %292 = arith.truncf %291 : vector<16x32xf32> to vector<16x32xbf16>
    %c1_130 = arith.constant 1 : index
    %c0_131 = arith.constant 0 : index
    %c0_132 = arith.constant 0 : index
    %293 = vector.load %arg7[%c1_130, %c0_131, %c0_132] : memref<2x32x64xbf16, #tpu.memory_space<vmem>>, vector<1x32x64xbf16>
    %294 = vector.shape_cast %293 : vector<1x32x64xbf16> to vector<32x64xbf16>
    %cst_133 = arith.constant dense<0.000000e+00> : vector<16x64xf32>
    %295 = tpu.matmul %292, %294, %cst_133 {dimension_numbers = #tpu.dot_dimension_numbers<[1], [0], [0], [1], [0, 0, 1, 1], [], []>} : vector<16x32xbf16>, vector<32x64xbf16>, vector<16x64xf32> -> vector<16x64xf32>
    %c12 = arith.constant 12 : index
    %c0_134 = arith.constant 0 : index
    %296 = vector.load %arg10[%c12, %c0_134] : memref<24x128xf32, #tpu.memory_space<vmem>>, vector<1x64xf32>
    %297 = vector.broadcast %296 : vector<1x64xf32> to vector<16x64xf32>
    %298 = arith.addf %295, %297 : vector<16x64xf32>
    %299 = arith.mulf %298, %298 : vector<16x64xf32>
    %300 = arith.mulf %298, %299 : vector<16x64xf32>
    %cst_135 = arith.constant 4.471500e-02 : f32
    %301 = vector.broadcast %cst_135 : f32 to vector<16x64xf32>
    %302 = arith.mulf %301, %300 : vector<16x64xf32>
    %303 = arith.addf %298, %302 : vector<16x64xf32>
    %cst_136 = arith.constant 0.797884583 : f32
    %304 = vector.broadcast %cst_136 : f32 to vector<16x64xf32>
    %305 = arith.mulf %304, %303 : vector<16x64xf32>
    %306 = math.tanh %305 : vector<16x64xf32>
    %cst_137 = arith.constant 1.000000e+00 : f32
    %307 = vector.broadcast %cst_137 : f32 to vector<16x64xf32>
    %308 = arith.addf %307, %306 : vector<16x64xf32>
    %cst_138 = arith.constant 5.000000e-01 : f32
    %309 = vector.broadcast %cst_138 : f32 to vector<16x64xf32>
    %310 = arith.mulf %309, %308 : vector<16x64xf32>
    %311 = arith.mulf %298, %310 : vector<16x64xf32>
    %312 = arith.truncf %311 : vector<16x64xf32> to vector<16x64xbf16>
    %c1_139 = arith.constant 1 : index
    %c0_140 = arith.constant 0 : index
    %c0_141 = arith.constant 0 : index
    %313 = vector.load %arg8[%c1_139, %c0_140, %c0_141] : memref<2x64x32xbf16, #tpu.memory_space<vmem>>, vector<1x64x32xbf16>
    %314 = vector.shape_cast %313 : vector<1x64x32xbf16> to vector<64x32xbf16>
    %cst_142 = arith.constant dense<0.000000e+00> : vector<16x32xf32>
    %315 = tpu.matmul %312, %314, %cst_142 {dimension_numbers = #tpu.dot_dimension_numbers<[1], [0], [0], [1], [0, 0, 1, 1], [], []>} : vector<16x64xbf16>, vector<64x32xbf16>, vector<16x32xf32> -> vector<16x32xf32>
    %c13 = arith.constant 13 : index
    %c0_143 = arith.constant 0 : index
    %316 = vector.load %arg10[%c13, %c0_143] : memref<24x128xf32, #tpu.memory_space<vmem>>, vector<1x32xf32>
    %317 = vector.broadcast %316 : vector<1x32xf32> to vector<16x32xf32>
    %318 = arith.addf %315, %317 : vector<16x32xf32>
    %319 = arith.addf %291, %318 : vector<16x32xf32>
    %c14 = arith.constant 14 : index
    %c0_144 = arith.constant 0 : index
    %320 = vector.load %arg10[%c14, %c0_144] : memref<24x128xf32, #tpu.memory_space<vmem>>, vector<1x32xf32>
    %c15 = arith.constant 15 : index
    %c0_145 = arith.constant 0 : index
    %321 = vector.load %arg10[%c15, %c0_145] : memref<24x128xf32, #tpu.memory_space<vmem>>, vector<1x32xf32>
    %cst_146 = arith.constant dense<0.000000e+00> : vector<16xf32>
    %322 = vector.multi_reduction <add>, %319, %cst_146 [1] : vector<16x32xf32> to vector<16xf32>
    %323 = vector.shape_cast %322 : vector<16xf32> to vector<16x1xf32>
    %cst_147 = arith.constant 3.200000e+01 : f32
    %324 = vector.broadcast %cst_147 : f32 to vector<16x1xf32>
    %325 = arith.divf %323, %324 : vector<16x1xf32>
    %326 = arith.mulf %319, %319 : vector<16x32xf32>
    %cst_148 = arith.constant dense<0.000000e+00> : vector<16xf32>
    %327 = vector.multi_reduction <add>, %326, %cst_148 [1] : vector<16x32xf32> to vector<16xf32>
    %328 = vector.shape_cast %327 : vector<16xf32> to vector<16x1xf32>
    %cst_149 = arith.constant 3.200000e+01 : f32
    %329 = vector.broadcast %cst_149 : f32 to vector<16x1xf32>
    %330 = arith.divf %328, %329 : vector<16x1xf32>
    %331 = arith.mulf %325, %325 : vector<16x1xf32>
    %332 = arith.subf %330, %331 : vector<16x1xf32>
    %333 = vector.broadcast %325 : vector<16x1xf32> to vector<16x32xf32>
    %334 = arith.subf %319, %333 : vector<16x32xf32>
    %cst_150 = arith.constant 9.99999996E-13 : f32
    %335 = vector.broadcast %cst_150 : f32 to vector<16x1xf32>
    %336 = arith.addf %332, %335 : vector<16x1xf32>
    %337 = math.rsqrt %336 : vector<16x1xf32>
    %338 = vector.broadcast %337 : vector<16x1xf32> to vector<16x32xf32>
    %339 = arith.mulf %334, %338 : vector<16x32xf32>
    %340 = vector.broadcast %320 : vector<1x32xf32> to vector<16x32xf32>
    %341 = arith.mulf %339, %340 : vector<16x32xf32>
    %342 = vector.broadcast %321 : vector<1x32xf32> to vector<16x32xf32>
    %343 = arith.addf %341, %342 : vector<16x32xf32>
    %344 = arith.truncf %343 : vector<16x32xf32> to vector<16x32xbf16>
    %c0_151 = arith.constant 0 : index
    %c0_152 = arith.constant 0 : index
    %345 = vector.load %arg9[%c0_151, %c0_152] : memref<32x128xbf16, #tpu.memory_space<vmem>>, vector<32x128xbf16>
    %cst_153 = arith.constant dense<0.000000e+00> : vector<16x128xf32>
    %346 = tpu.matmul %344, %345, %cst_153 {dimension_numbers = #tpu.dot_dimension_numbers<[1], [0], [0], [1], [0, 0, 1, 1], [], []>} : vector<16x32xbf16>, vector<32x128xbf16>, vector<16x128xf32> -> vector<16x128xf32>
    %c16 = arith.constant 16 : index
    %c0_154 = arith.constant 0 : index
    %347 = vector.load %arg10[%c16, %c0_154] : memref<24x128xf32, #tpu.memory_space<vmem>>, vector<1x128xf32>
    %348 = vector.broadcast %347 : vector<1x128xf32> to vector<16x128xf32>
    %349 = arith.addf %346, %348 : vector<16x128xf32>
    %c0_155 = arith.constant 0 : index
    %c0_156 = arith.constant 0 : index
    %350 = vector.load %arg11[%c0_155, %c0_156] : memref<16x128xf32, #tpu.memory_space<vmem>>, vector<16x128xf32>
    tpu.vector_store %arg11[%c0_155, %c0_156], %349 {strides = array<i32>} : memref<16x128xf32, #tpu.memory_space<vmem>>, vector<16x128xf32>,
    return
  }
  func.func @transform_0(%arg0: i32) -> (i32, i32) {
    %c0_i32 = arith.constant 0 : i32
    %c0_i32_0 = arith.constant 0 : i32
    %c0_i32_1 = arith.constant 0 : i32
    return %c0_i32, %c0_i32_0 : i32, i32
  }
  func.func @transform_1(%arg0: i32) -> (i32, i32) {
    %c0_i32 = arith.constant 0 : i32
    %c0_i32_0 = arith.constant 0 : i32
    %c0_i32_1 = arith.constant 0 : i32
    return %c0_i32, %c0_i32_0 : i32, i32
  }
  func.func @transform_2(%arg0: i32) -> (i32, i32) {
    %c0_i32 = arith.constant 0 : i32
    %c0_i32_0 = arith.constant 0 : i32
    %c0_i32_1 = arith.constant 0 : i32
    return %c0_i32, %c0_i32_0 : i32, i32
  }
  func.func @transform_3(%arg0: i32) -> (i32, i32, i32, i32) {
    %c0_i32 = arith.constant 0 : i32
    %c0_i32_0 = arith.constant 0 : i32
    %c0_i32_1 = arith.constant 0 : i32
    %c0_i32_2 = arith.constant 0 : i32
    %c0_i32_3 = arith.constant 0 : i32
    return %c0_i32, %c0_i32_0, %c0_i32_1, %c0_i32_2 : i32, i32, i32, i32
  }
  func.func @transform_4(%arg0: i32) -> (i32, i32, i32, i32) {
    %c0_i32 = arith.constant 0 : i32
    %c0_i32_0 = arith.constant 0 : i32
    %c0_i32_1 = arith.constant 0 : i32
    %c0_i32_2 = arith.constant 0 : i32
    %c0_i32_3 = arith.constant 0 : i32
    return %c0_i32, %c0_i32_0, %c0_i32_1, %c0_i32_2 : i32, i32, i32, i32
  }
  func.func @transform_5(%arg0: i32) -> (i32, i32, i32, i32) {
    %c0_i32 = arith.constant 0 : i32
    %c0_i32_0 = arith.constant 0 : i32
    %c0_i32_1 = arith.constant 0 : i32
    %c0_i32_2 = arith.constant 0 : i32
    %c0_i32_3 = arith.constant 0 : i32
    return %c0_i32, %c0_i32_0, %c0_i32_1, %c0_i32_2 : i32, i32, i32, i32
  }
  func.func @transform_6(%arg0: i32) -> (i32, i32, i32) {
    %c0_i32 = arith.constant 0 : i32
    %c0_i32_0 = arith.constant 0 : i32
    %c0_i32_1 = arith.constant 0 : i32
    %c0_i32_2 = arith.constant 0 : i32
    return %c0_i32, %c0_i32_0, %c0_i32_1 : i32, i32, i32
  }
  func.func @transform_7(%arg0: i32) -> (i32, i32, i32) {
    %c0_i32 = arith.constant 0 : i32
    %c0_i32_0 = arith.constant 0 : i32
    %c0_i32_1 = arith.constant 0 : i32
    %c0_i32_2 = arith.constant 0 : i32
    return %c0_i32, %c0_i32_0, %c0_i32_1 : i32, i32, i32
  }
  func.func @transform_8(%arg0: i32) -> (i32, i32) {
    %c0_i32 = arith.constant 0 : i32
    %c0_i32_0 = arith.constant 0 : i32
    %c0_i32_1 = arith.constant 0 : i32
    return %c0_i32, %c0_i32_0 : i32, i32
  }
  func.func @transform_9(%arg0: i32) -> (i32, i32) {
    %c0_i32 = arith.constant 0 : i32
    %c0_i32_0 = arith.constant 0 : i32
    %c0_i32_1 = arith.constant 0 : i32
    return %c0_i32, %c0_i32_0 : i32, i32
  }
  func.func @transform_10(%arg0: i32) -> (i32, i32) {
    %c0_i32 = arith.constant 0 : i32
    %c0_i32_0 = arith.constant 0 : i32
    %c0_i32_1 = arith.constant 0 : i32
    return %c0_i32, %c0_i32_0 : i32, i32
  }
}

</mosaic_0001>

<llo_original>
// kernel: tpu_custom_call.1
$region0: #{tpu_custom_call.1}
  #allocation0 [shape = 'u32[]', space=smem, size = 0x4, offset = 0x4, fixed_abs, tag = 'smem constant byte address 0x4 - core index']
  #allocation1 [shape = 'u32[72,128]{1,0:T(1,128)}', space=vmem, size = 0x9000, scoped, tag = 'internal scratch']
  %s0 = inlined_call_operand.vmem [shape: s32[16,1], index: 0, kind: input, shape index: {}]
  %s1 = inlined_call_operand.vmem [shape: bf16[64,32], index: 1, kind: input, shape index: {}]
  %s2 = inlined_call_operand.vmem [shape: f32[32,32], index: 2, kind: input, shape index: {}]
  %s3 = inlined_call_operand.vmem [shape: bf16[2,4,32,24], index: 3, kind: input, shape index: {}]
  %s4 = inlined_call_operand.vmem [shape: f32[2,4,1,8], index: 4, kind: input, shape index: {}]
  %s5 = inlined_call_operand.vmem [shape: bf16[2,4,8,32], index: 5, kind: input, shape index: {}]
  %s6 = inlined_call_operand.vmem [shape: bf16[2,32,64], index: 6, kind: input, shape index: {}]
  %s7 = inlined_call_operand.vmem [shape: bf16[2,64,32], index: 7, kind: input, shape index: {}]
  %s8 = inlined_call_operand.vmem [shape: bf16[32,128], index: 8, kind: input, shape index: {}]
  %s9 = inlined_call_operand.vmem [shape: f32[24,128], index: 9, kind: input, shape index: {}]
  %s10 = inlined_call_operand.hbm [shape: f32[16,128], index: 10, kind: output, shape index: {}]
  %s11 = sld [smem:[#allocation0]]
  $region50: #{tpu_custom_call.1} parent=0
    _
  %s13 = ssub.s32 1, %s11
  %s14 = scalar_select 0, %s13, %s11
  $region1: #{tpu_custom_call.1} parent=0
    #allocation2 [shape = 'u8[8192]{0}', space=vmem, size = 0x2000, scoped, tag = 'output window, operand 0, single buffered']
    #allocation3 [shape = 's32[1]{0}', space=sflag, size = 0x4, scoped, tag = 'scoped memory for tpu_custom_call.1']
    %15 = vsyncpa [#allocation3], 0
    // Predicated region
    $region2: #{tpu_custom_call.1} parent=1 // pred_check
      _
    $region3: #{tpu_custom_call.1} parent=1 // pred_check_branch
      %17 = sbr.rel (0) target = $region5
    $region4: #{tpu_custom_call.1} parent=1 // pred_region
      _
    $region5: #{tpu_custom_call.1} parent=1 // pred_fallthru
      _
    // Predicated region
    $region6: #{tpu_custom_call.1} parent=1 // pred_check
      _
    $region7: #{tpu_custom_call.1} parent=1 // pred_check_branch
      %19 = sbr.rel (0) target = $region9
    $region8: #{tpu_custom_call.1} parent=1 // pred_region
      _
    $region9: #{tpu_custom_call.1} parent=1 // pred_fallthru
      _
    // Predicated region
    $region10: #{tpu_custom_call.1} parent=1 // pred_check
      _
    $region11: #{tpu_custom_call.1} parent=1 // pred_check_branch
      %21 = sbr.rel (0) target = $region13
    $region12: #{tpu_custom_call.1} parent=1 // pred_region
      _
    $region13: #{tpu_custom_call.1} parent=1 // pred_fallthru
      _
    // Predicated region
    $region14: #{tpu_custom_call.1} parent=1 // pred_check
      _
    $region15: #{tpu_custom_call.1} parent=1 // pred_check_branch
      %23 = sbr.rel (0) target = $region17
    $region16: #{tpu_custom_call.1} parent=1 // pred_region
      _
    $region17: #{tpu_custom_call.1} parent=1 // pred_fallthru
      _
    // Predicated region
    $region18: #{tpu_custom_call.1} parent=1 // pred_check
      _
    $region19: #{tpu_custom_call.1} parent=1 // pred_check_branch
      %25 = sbr.rel (0) target = $region21
    $region20: #{tpu_custom_call.1} parent=1 // pred_region
      _
    $region21: #{tpu_custom_call.1} parent=1 // pred_fallthru
      _
    // Predicated region
    $region22: #{tpu_custom_call.1} parent=1 // pred_check
      _
    $region23: #{tpu_custom_call.1} parent=1 // pred_check_branch
      %27 = sbr.rel (0) target = $region25
    $region24: #{tpu_custom_call.1} parent=1 // pred_region
      _
    $region25: #{tpu_custom_call.1} parent=1 // pred_fallthru
      _
    // Predicated region
    $region26: #{tpu_custom_call.1} parent=1 // pred_check
      _
    $region27: #{tpu_custom_call.1} parent=1 // pred_check_branch
      %29 = sbr.rel (0) target = $region29
    $region28: #{tpu_custom_call.1} parent=1 // pred_region
      _
    $region29: #{tpu_custom_call.1} parent=1 // pred_fallthru
      _
    // Predicated region
    $region30: #{tpu_custom_call.1} parent=1 // pred_check
      _
    $region31: #{tpu_custom_call.1} parent=1 // pred_check_branch
      %31 = sbr.rel (0) target = $region33
    $region32: #{tpu_custom_call.1} parent=1 // pred_region
      _
    $region33: #{tpu_custom_call.1} parent=1 // pred_fallthru
      _
    // Predicated region
    $region34: #{tpu_custom_call.1} parent=1 // pred_check
      _
    $region35: #{tpu_custom_call.1} parent=1 // pred_check_branch
      %33 = sbr.rel (0) target = $region37
    $region36: #{tpu_custom_call.1} parent=1 // pred_region
      _
    $region37: #{tpu_custom_call.1} parent=1 // pred_fallthru
      _
    // Predicated region
    $region38: #{tpu_custom_call.1} parent=1 // pred_check
      _
    $region39: #{tpu_custom_call.1} parent=1 // pred_check_branch
      %35 = sbr.rel (0) target = $region41
    $region40: #{tpu_custom_call.1} parent=1 // pred_region
      _
    $region41: #{tpu_custom_call.1} parent=1 // pred_fallthru
      _
    %v37 = vld [vmem:[%s0] sm:$0xff]
    %v38 = vld [vmem:[%s0 + $0x8] sm:$0xff]
    %v39 = vlaneseq
    %v40 = vand.u32 %v39, 127
    %41 = vset.pattern.permute.xlu0 0
    %42 = vperm.xlu0 %41, %v37
    %v43 = vpop.permute.xlu0 %42
    %44 = vset.pattern.permute.xlu0 0
    %45 = vperm.xlu0 %44, %v38
    %v46 = vpop.permute.xlu0 %45
    %vm47 = vcmp.eq.s32.totalorder %v43, %v40
    %vm48 = vcmp.eq.s32.totalorder %v46, %v40
    %v49 = vsel %vm47, 1, 0
    %v50 = vsel %vm48, 1, 0
    %v51 = vcvt.s32.f32 %v49
    %v52 = vcvt.s32.f32 %v50
    %v53 = vpack.c.bf16 %v52, %v51
    %v54 = vld [vmem:[%s1] sm:$0xf]
    %v55 = vld [vmem:[%s1 + $0x4] sm:$0xf]
    %v56 = vld [vmem:[%s1 + $0x8] sm:$0xf]
    %v57 = vld [vmem:[%s1 + $0xc] sm:$0xf]
    %v58 = vld [vmem:[%s1 + $0x10] sm:$0xf]
    %v59 = vld [vmem:[%s1 + $0x14] sm:$0xf]
    %v60 = vld [vmem:[%s1 + $0x18] sm:$0xf]
    %v61 = vld [vmem:[%s1 + $0x1c] sm:$0xf]
    %v62 = vld [vmem:[%s2] sm:$0xff]
    %v71 = vunpack.c.l.b16 %v54
    %v72 = vunpack.c.l.b16 %v55
    %v73 = vunpack.c.l.b16 %v56
    %v74 = vunpack.c.l.b16 %v57
    %v75 = vunpack.c.l.b16 %v58
    %v76 = vunpack.c.l.b16 %v59
    %v77 = vunpack.c.l.b16 %v60
    %v78 = vunpack.c.l.b16 %v61
    %v79 = vpack.c.b16 %v72, %v71
    %v80 = vpack.c.b16 %v74, %v73
    %v81 = vpack.c.b16 %v76, %v75
    %v82 = vpack.c.b16 %v78, %v77
    %vm87 = vcmask 523264
    %v89 = vsel %vm87, %v53, 0
    %91 = vmatpush.bf16.msra.mxu0 0
    %92 = vmatpush.bf16.msra.mxu0 0
    %93 = vmatpush.bf16.msra.mxu0 0
    %94 = vmatpush.bf16.msra.mxu0 0
    %95 = vmatpush.bf16.msra.mxu0 %v82
    %96 = vmatpush.bf16.msra.mxu0 %v81
    %97 = vmatpush.bf16.msra.mxu0 %v80
    %98 = vmatpush.bf16.msra.mxu0 %v79
    %99 = vmatmul.bf16.gmra.mxu0 %v89
    %v100 = vpop.f32.mrf.mxu0
    %v101 = vadd.f32 %v62, %v100
    %v102 = vpop.f32.mrf.mxu0
    %v103 = vadd.f32 %v62, %v102
    %104 = vdwg.mxu0
    %v105 = vld [vmem:[%s9] sm:$0x1]
    %v106 = vld [vmem:[%s9 + $0x1] sm:$0x1]
    %vm107 = vcmask 261120
    %v108 = vsel %vm107, %v101, 0.0
    %109 = vadd.xlane.f32.xlu0 %v108
    %v110 = vpop.xlane.xlu0 %109
    %v111 = vsel %vm107, %v103, 0.0
    %112 = vadd.xlane.f32.xlu0 %v111
    %v113 = vpop.xlane.xlu0 %112
    %v114 = vrcp.pop 32.0
    %v115 = vmul.f32 32.0, %v114
    %v116 = vsub.f32 1.0, %v115
    %v117 = vmul.f32 %v114, %v116
    %v118 = vadd.f32 %v114, %v117
    %vm119 = vweird.f32 %v114
    %v120 = vsel %vm119, %v114, %v118
    %v121 = vmul.f32 %v110, %v120
    %v122 = vmul.f32 %v113, %v120
    %v123 = vmul.f32 %v101, %v101
    %v124 = vmul.f32 %v103, %v103
    %v125 = vsel %vm107, %v123, 0.0
    %126 = vadd.xlane.f32.xlu0 %v125
    %v127 = vpop.xlane.xlu0 %126
    %v128 = vsel %vm107, %v124, 0.0
    %129 = vadd.xlane.f32.xlu0 %v128
    %v130 = vpop.xlane.xlu0 %129
    %v131 = vmul.f32 %v127, %v120
    %v132 = vmul.f32 %v130, %v120
    %v133 = vmul.f32 %v121, %v121
    %v134 = vmul.f32 %v122, %v122
    %v135 = vsub.f32 %v131, %v133
    %v136 = vsub.f32 %v132, %v134
    %v137 = vsub.f32 %v101, %v121
    %v138 = vsub.f32 %v103, %v122
    %v139 = vadd.f32 %v135, 1e-12
    %v140 = vadd.f32 %v136, 1e-12
    %v141 = vrsqrt.pop %v139
    %v142 = vmul.f32 %v141, %v139
    %v143 = vmul.f32 %v142, %v141
    %v144 = vmul.f32 0.5, %v143
    %v145 = vsub.f32 1.5, %v144
    %v146 = vmul.f32 %v141, %v145
    %vm147 = vweird.f32 %v139
    %vm148 = vweird.f32 %v141
    %vm149 = vmor %vm147, %vm148
    %v150 = vsel %vm149, %v141, %v146
    %v151 = vrsqrt.pop %v140
    %v152 = vmul.f32 %v151, %v140
    %v153 = vmul.f32 %v152, %v151
    %v154 = vmul.f32 0.5, %v153
    %v155 = vsub.f32 1.5, %v154
    %v156 = vmul.f32 %v151, %v155
    %vm157 = vweird.f32 %v140
    %vm158 = vweird.f32 %v151
    %vm159 = vmor %vm157, %vm158
    %v160 = vsel %vm159, %v151, %v156
    %v161 = vmul.f32 %v137, %v150
    %v162 = vmul.f32 %v138, %v160
    %v163 = vperm.slane %v105, 0
    %v164 = vmul.f32 %v161, %v163
    %v165 = vmul.f32 %v162, %v163
    %v166 = vperm.slane %v106, 0
    %v167 = vadd.f32 %v164, %v166
    %v168 = vadd.f32 %v165, %v166
    %v169 = vpack.c.bf16 %v167, %v167
    %v170 = vpack.c.bf16 %v168, %v168
    %v171 = vld [vmem:[%s3] sm:$0xf]
    %v172 = vld [vmem:[%s3 + $0x4] sm:$0xf]
    %v173 = vld [vmem:[%s3 + $0x8] sm:$0xf]
    %v174 = vld [vmem:[%s3 + $0xc] sm:$0xf]
    %v175 = vld [vmem:[%s3 + $0x10] sm:$0xf]
    %v176 = vld [vmem:[%s3 + $0x14] sm:$0xf]
    %v177 = vld [vmem:[%s3 + $0x18] sm:$0xf]
    %v178 = vld [vmem:[%s3 + $0x1c] sm:$0xf]
    %v179 = vld [vmem:[%s3 + $0x20] sm:$0xf]
    %v180 = vld [vmem:[%s3 + $0x24] sm:$0xf]
    %v181 = vld [vmem:[%s3 + $0x28] sm:$0xf]
    %v182 = vld [vmem:[%s3 + $0x2c] sm:$0xf]
    %v183 = vld [vmem:[%s3 + $0x30] sm:$0xf]
    %v184 = vld [vmem:[%s3 + $0x34] sm:$0xf]
    %v185 = vld [vmem:[%s3 + $0x38] sm:$0xf]
    %v186 = vld [vmem:[%s3 + $0x3c] sm:$0xf]
    %v191 = vunpack.c.l.b16 %v171
    %v192 = vunpack.c.l.b16 %v172
    %v193 = vunpack.c.l.b16 %v173
    %v194 = vunpack.c.l.b16 %v174
    %v195 = vpack.c.b16 %v192, %v191
    %v196 = vpack.c.b16 %v194, %v193
    %v200 = vsel %vm107, %v169, 0
    %202 = vmatpush.bf16.msra.mxu0 0
    %203 = vmatpush.bf16.msra.mxu0 0
    %204 = vmatpush.bf16.msra.mxu0 0
    %205 = vmatpush.bf16.msra.mxu0 0
    %206 = vmatpush.bf16.msra.mxu0 0
    %207 = vmatpush.bf16.msra.mxu0 0
    %208 = vmatpush.bf16.msra.mxu0 %v196
    %209 = vmatpush.bf16.msra.mxu0 %v195
    %210 = vmatmul.bf16.gmra.mxu0 %v200
    %v211 = vpop.f32.mrf.mxu0
    %v212 = vadd.f32 0.0, %v211
    %v213 = vpop.f32.mrf.mxu0
    %214 = vdwg.mxu0
    %v219 = vunpack.c.l.b16 %v175
    %v220 = vunpack.c.l.b16 %v176
    %v221 = vunpack.c.l.b16 %v177
    %v222 = vunpack.c.l.b16 %v178
    %v223 = vpack.c.b16 %v220, %v219
    %v224 = vpack.c.b16 %v222, %v221
    %227 = vmatpush.bf16.msra.mxu0 0
    %228 = vmatpush.bf16.msra.mxu0 0
    %229 = vmatpush.bf16.msra.mxu0 0
    %230 = vmatpush.bf16.msra.mxu0 0
    %231 = vmatpush.bf16.msra.mxu0 0
    %232 = vmatpush.bf16.msra.mxu0 0
    %233 = vmatpush.bf16.msra.mxu0 %v224
    %234 = vmatpush.bf16.msra.mxu0 %v223
    %235 = vmatmul.bf16.gmra.mxu0 %v200
    %v236 = vpop.f32.mrf.mxu0
    %v237 = vadd.f32 0.0, %v236
    %v238 = vpop.f32.mrf.mxu0
    %239 = vdwg.mxu0
    %v244 = vunpack.c.l.b16 %v179
    %v245 = vunpack.c.l.b16 %v180
    %v246 = vunpack.c.l.b16 %v181
    %v247 = vunpack.c.l.b16 %v182
    %v248 = vpack.c.b16 %v245, %v244
    %v249 = vpack.c.b16 %v247, %v246
    %252 = vmatpush.bf16.msra.mxu0 0
    %253 = vmatpush.bf16.msra.mxu0 0
    %254 = vmatpush.bf16.msra.mxu0 0
    %255 = vmatpush.bf16.msra.mxu0 0
    %256 = vmatpush.bf16.msra.mxu0 0
    %257 = vmatpush.bf16.msra.mxu0 0
    %258 = vmatpush.bf16.msra.mxu0 %v249
    %259 = vmatpush.bf16.msra.mxu0 %v248
    %260 = vmatmul.bf16.gmra.mxu0 %v200
    %v261 = vpop.f32.mrf.mxu0
    %v262 = vadd.f32 0.0, %v261
    %v263 = vpop.f32.mrf.mxu0
    %264 = vdwg.mxu0
    %v269 = vunpack.c.l.b16 %v183
    %v270 = vunpack.c.l.b16 %v184
    %v271 = vunpack.c.l.b16 %v185
    %v272 = vunpack.c.l.b16 %v186
    %v273 = vpack.c.b16 %v270, %v269
    %v274 = vpack.c.b16 %v272, %v271
    %277 = vmatpush.bf16.msra.mxu0 0
    %278 = vmatpush.bf16.msra.mxu0 0
    %279 = vmatpush.bf16.msra.mxu0 0
    %280 = vmatpush.bf16.msra.mxu0 0
    %281 = vmatpush.bf16.msra.mxu0 0
    %282 = vmatpush.bf16.msra.mxu0 0
    %283 = vmatpush.bf16.msra.mxu0 %v274
    %284 = vmatpush.bf16.msra.mxu0 %v273
    %285 = vmatmul.bf16.gmra.mxu0 %v200
    %v286 = vpop.f32.mrf.mxu0
    %v287 = vadd.f32 0.0, %v286
    %v288 = vpop.f32.mrf.mxu0
    %289 = vdwg.mxu0
    %v290 = vld [vmem:[%s4] sm:$0x1]
    %v291 = vld [vmem:[%s4 + $0x1] sm:$0x1]
    %v292 = vld [vmem:[%s4 + $0x2] sm:$0x1]
    %v293 = vld [vmem:[%s4 + $0x3] sm:$0x1]
    %v298 = vperm.slane %v290, 0
    %v299 = vperm.slane %v291, 0
    %v300 = vperm.slane %v292, 0
    %v301 = vperm.slane %v293, 0
    %v306 = vadd.f32 %v212, %v298
    %v307 = vadd.f32 %v237, %v299
    %v308 = vadd.f32 %v262, %v300
    %v309 = vadd.f32 %v287, %v301
    %v310 = vpack.c.bf16 %v306, %v306
    %v311 = vpack.c.bf16 %v307, %v307
    %v312 = vpack.c.bf16 %v308, %v308
    %v313 = vpack.c.bf16 %v309, %v309
    %v314 = vpack.c.bf16 %v212, %v212
    %v315 = vpack.c.bf16 %v237, %v237
    %v316 = vpack.c.bf16 %v262, %v262
    %v317 = vpack.c.bf16 %v287, %v287
    %v319 = vunpack.c.l.b16 %v314
    %v320 = vpack.c.b16 %v319, %v319
    %321 = vrot.lane.b32.xlu0 %v320, 120
    %v322 = vpop.permute.xlu0 %321
    %vm323 = vcmask 64512
    %v325 = vsel %vm323, %v310, 0
    %v328 = vsel %vm323, %v322, 0
    %330 = vmatpush.bf16.xpose.msra.mxu0 0
    %331 = vmatpush.bf16.xpose.msra.mxu0 0
    %332 = vmatpush.bf16.xpose.msra.mxu0 0
    %333 = vmatpush.bf16.xpose.msra.mxu0 0
    %334 = vmatpush.bf16.xpose.msra.mxu0 0
    %335 = vmatpush.bf16.xpose.msra.mxu0 0
    %336 = vmatpush.bf16.xpose.msra.mxu0 0
    %337 = vmatpush.bf16.xpose.msra.mxu0 %v328
    %338 = vmatmul.bf16.gmra.mxu0 %v325
    %v339 = vpop.f32.mrf.mxu0
    %v340 = vadd.f32 0.0, %v339
    %v341 = vpop.f32.mrf.mxu0
    %342 = vdwg.mxu0
    %v344 = vunpack.c.l.b16 %v315
    %v345 = vpack.c.b16 %v344, %v344
    %346 = vrot.lane.b32.xlu0 %v345, 120
    %v347 = vpop.permute.xlu0 %346
    %v349 = vsel %vm323, %v311, 0
    %v352 = vsel %vm323, %v347, 0
    %354 = vmatpush.bf16.xpose.msra.mxu0 0
    %355 = vmatpush.bf16.xpose.msra.mxu0 0
    %356 = vmatpush.bf16.xpose.msra.mxu0 0
    %357 = vmatpush.bf16.xpose.msra.mxu0 0
    %358 = vmatpush.bf16.xpose.msra.mxu0 0
    %359 = vmatpush.bf16.xpose.msra.mxu0 0
    %360 = vmatpush.bf16.xpose.msra.mxu0 0
    %361 = vmatpush.bf16.xpose.msra.mxu0 %v352
    %362 = vmatmul.bf16.gmra.mxu0 %v349
    %v363 = vpop.f32.mrf.mxu0
    %v364 = vadd.f32 0.0, %v363
    %v365 = vpop.f32.mrf.mxu0
    %366 = vdwg.mxu0
    %v368 = vunpack.c.l.b16 %v316
    %v369 = vpack.c.b16 %v368, %v368
    %370 = vrot.lane.b32.xlu0 %v369, 120
    %v371 = vpop.permute.xlu0 %370
    %v373 = vsel %vm323, %v312, 0
    %v376 = vsel %vm323, %v371, 0
    %378 = vmatpush.bf16.xpose.msra.mxu0 0
    %379 = vmatpush.bf16.xpose.msra.mxu0 0
    %380 = vmatpush.bf16.xpose.msra.mxu0 0
    %381 = vmatpush.bf16.xpose.msra.mxu0 0
    %382 = vmatpush.bf16.xpose.msra.mxu0 0
    %383 = vmatpush.bf16.xpose.msra.mxu0 0
    %384 = vmatpush.bf16.xpose.msra.mxu0 0
    %385 = vmatpush.bf16.xpose.msra.mxu0 %v376
    %386 = vmatmul.bf16.gmra.mxu0 %v373
    %v387 = vpop.f32.mrf.mxu0
    %v388 = vadd.f32 0.0, %v387
    %v389 = vpop.f32.mrf.mxu0
    %390 = vdwg.mxu0
    %v392 = vunpack.c.l.b16 %v317
    %v393 = vpack.c.b16 %v392, %v392
    %394 = vrot.lane.b32.xlu0 %v393, 120
    %v395 = vpop.permute.xlu0 %394
    %v397 = vsel %vm323, %v313, 0
    %v400 = vsel %vm323, %v395, 0
    %402 = vmatpush.bf16.xpose.msra.mxu0 0
    %403 = vmatpush.bf16.xpose.msra.mxu0 0
    %404 = vmatpush.bf16.xpose.msra.mxu0 0
    %405 = vmatpush.bf16.xpose.msra.mxu0 0
    %406 = vmatpush.bf16.xpose.msra.mxu0 0
    %407 = vmatpush.bf16.xpose.msra.mxu0 0
    %408 = vmatpush.bf16.xpose.msra.mxu0 0
    %409 = vmatpush.bf16.xpose.msra.mxu0 %v400
    %410 = vmatmul.bf16.gmra.mxu0 %v397
    %v411 = vpop.f32.mrf.mxu0
    %v412 = vadd.f32 0.0, %v411
    %v413 = vpop.f32.mrf.mxu0
    %414 = vdwg.mxu0
    %v415 = vmul.f32 %v340, 0.35355338
    %v416 = vmul.f32 %v364, 0.35355338
    %v417 = vmul.f32 %v388, 0.35355338
    %v418 = vmul.f32 %v412, 0.35355338
    %v419 = vsel %vm323, %v415, -inf
    %420 = vmax.xlane.f32.xlu0 %v419
    %v421 = vpop.xlane.xlu0 %420
    %v422 = vsel %vm323, %v416, -inf
    %423 = vmax.xlane.f32.xlu0 %v422
    %v424 = vpop.xlane.xlu0 %423
    %v425 = vsel %vm323, %v417, -inf
    %426 = vmax.xlane.f32.xlu0 %v425
    %v427 = vpop.xlane.xlu0 %426
    %v428 = vsel %vm323, %v418, -inf
    %429 = vmax.xlane.f32.xlu0 %v428
    %v430 = vpop.xlane.xlu0 %429
    %v431 = vsub.f32 %v415, %v421
    %v432 = vsub.f32 %v416, %v424
    %v433 = vsub.f32 %v417, %v427
    %v434 = vsub.f32 %v418, %v430
    %v435 = vmul.f32 %v431, 1.442695
    %v436 = vpow.pop %v435
    %v437 = vmul.f32 %v432, 1.442695
    %v438 = vpow.pop %v437
    %v439 = vmul.f32 %v433, 1.442695
    %v440 = vpow.pop %v439
    %v441 = vmul.f32 %v434, 1.442695
    %v442 = vpow.pop %v441
    %v443 = vsel %vm323, %v436, 0.0
    %444 = vadd.xlane.f32.xlu0 %v443
    %v445 = vpop.xlane.xlu0 %444
    %v446 = vsel %vm323, %v438, 0.0
    %447 = vadd.xlane.f32.xlu0 %v446
    %v448 = vpop.xlane.xlu0 %447
    %v449 = vsel %vm323, %v440, 0.0
    %450 = vadd.xlane.f32.xlu0 %v449
    %v451 = vpop.xlane.xlu0 %450
    %v452 = vsel %vm323, %v442, 0.0
    %453 = vadd.xlane.f32.xlu0 %v452
    %v454 = vpop.xlane.xlu0 %453
    %v455 = vrcp.pop %v445
    %v456 = vrcp.pop %v448
    %v457 = vrcp.pop %v451
    %v458 = vrcp.pop %v454
    %v459 = vmul.f32 %v436, %v455
    %v460 = vmul.f32 %v438, %v456
    %v461 = vmul.f32 %v440, %v457
    %v462 = vmul.f32 %v442, %v458
    %v463 = vpack.c.bf16 %v459, %v459
    %v464 = vpack.c.bf16 %v460, %v460
    %v465 = vpack.c.bf16 %v461, %v461
    %v466 = vpack.c.bf16 %v462, %v462
    %467 = vrot.lane.b32.xlu0 %v320, 112
    %v468 = vpop.permute.xlu0 %467
    %v470 = vsel %vm323, %v463, 0
    %vm472 = vcmask 1043456
    %v474 = vsel %vm472, %v468, 0
    %476 = vmatpush.bf16.msra.mxu0 0
    %477 = vmatpush.bf16.msra.mxu0 0
    %478 = vmatpush.bf16.msra.mxu0 0
    %479 = vmatpush.bf16.msra.mxu0 0
    %480 = vmatpush.bf16.msra.mxu0 0
    %481 = vmatpush.bf16.msra.mxu0 0
    %482 = vmatpush.bf16.msra.mxu0 0
    %483 = vmatpush.bf16.msra.mxu0 %v474
    %484 = vmatmul.bf16.gmra.mxu0 %v470
    %v485 = vpop.f32.mrf.mxu0
    %v486 = vadd.f32 0.0, %v485
    %v487 = vpop.f32.mrf.mxu0
    %488 = vdwg.mxu0
    %489 = vrot.lane.b32.xlu0 %v345, 112
    %v490 = vpop.permute.xlu0 %489
    %v492 = vsel %vm323, %v464, 0
    %v495 = vsel %vm472, %v490, 0
    %497 = vmatpush.bf16.msra.mxu0 0
    %498 = vmatpush.bf16.msra.mxu0 0
    %499 = vmatpush.bf16.msra.mxu0 0
    %500 = vmatpush.bf16.msra.mxu0 0
    %501 = vmatpush.bf16.msra.mxu0 0
    %502 = vmatpush.bf16.msra.mxu0 0
    %503 = vmatpush.bf16.msra.mxu0 0
    %504 = vmatpush.bf16.msra.mxu0 %v495
    %505 = vmatmul.bf16.gmra.mxu0 %v492
    %v506 = vpop.f32.mrf.mxu0
    %v507 = vadd.f32 0.0, %v506
    %v508 = vpop.f32.mrf.mxu0
    %509 = vdwg.mxu0
    %510 = vrot.lane.b32.xlu0 %v369, 112
    %v511 = vpop.permute.xlu0 %510
    %v513 = vsel %vm323, %v465, 0
    %v516 = vsel %vm472, %v511, 0
    %518 = vmatpush.bf16.msra.mxu0 0
    %519 = vmatpush.bf16.msra.mxu0 0
    %520 = vmatpush.bf16.msra.mxu0 0
    %521 = vmatpush.bf16.msra.mxu0 0
    %522 = vmatpush.bf16.msra.mxu0 0
    %523 = vmatpush.bf16.msra.mxu0 0
    %524 = vmatpush.bf16.msra.mxu0 0
    %525 = vmatpush.bf16.msra.mxu0 %v516
    %526 = vmatmul.bf16.gmra.mxu0 %v513
    %v527 = vpop.f32.mrf.mxu0
    %v528 = vadd.f32 0.0, %v527
    %v529 = vpop.f32.mrf.mxu0
    %530 = vdwg.mxu0
    %531 = vrot.lane.b32.xlu0 %v393, 112
    %v532 = vpop.permute.xlu0 %531
    %v534 = vsel %vm323, %v466, 0
    %v537 = vsel %vm472, %v532, 0
    %539 = vmatpush.bf16.msra.mxu0 0
    %540 = vmatpush.bf16.msra.mxu0 0
    %541 = vmatpush.bf16.msra.mxu0 0
    %542 = vmatpush.bf16.msra.mxu0 0
    %543 = vmatpush.bf16.msra.mxu0 0
    %544 = vmatpush.bf16.msra.mxu0 0
    %545 = vmatpush.bf16.msra.mxu0 0
    %546 = vmatpush.bf16.msra.mxu0 %v537
    %547 = vmatmul.bf16.gmra.mxu0 %v534
    %v548 = vpop.f32.mrf.mxu0
    %v549 = vadd.f32 0.0, %v548
    %v550 = vpop.f32.mrf.mxu0
    %551 = vdwg.mxu0
    %v552 = vpack.c.bf16 %v486, %v486
    %v553 = vpack.c.bf16 %v507, %v507
    %v554 = vpack.c.bf16 %v528, %v528
    %v555 = vpack.c.bf16 %v549, %v549
    %v556 = vld [vmem:[%s5] sm:$0xf]
    %v557 = vld [vmem:[%s5 + $0x4] sm:$0xf]
    %v558 = vld [vmem:[%s5 + $0x8] sm:$0xf]
    %v559 = vld [vmem:[%s5 + $0xc] sm:$0xf]
    %v561 = vsel %vm323, %v552, 0
    %v564 = vsel %vm472, %v556, 0
    %566 = vmatpush.bf16.msra.mxu0 0
    %567 = vmatpush.bf16.msra.mxu0 0
    %568 = vmatpush.bf16.msra.mxu0 0
    %569 = vmatpush.bf16.msra.mxu0 0
    %570 = vmatpush.bf16.msra.mxu0 0
    %571 = vmatpush.bf16.msra.mxu0 0
    %572 = vmatpush.bf16.msra.mxu0 0
    %573 = vmatpush.bf16.msra.mxu0 %v564
    %574 = vmatmul.bf16.gmra.mxu0 %v561
    %v575 = vpop.f32.mrf.mxu0
    %v576 = vadd.f32 0.0, %v575
    %v577 = vpop.f32.mrf.mxu0
    %578 = vdwg.mxu0
    %v580 = vsel %vm323, %v553, 0
    %v583 = vsel %vm472, %v557, 0
    %585 = vmatpush.bf16.msra.mxu0 0
    %586 = vmatpush.bf16.msra.mxu0 0
    %587 = vmatpush.bf16.msra.mxu0 0
    %588 = vmatpush.bf16.msra.mxu0 0
    %589 = vmatpush.bf16.msra.mxu0 0
    %590 = vmatpush.bf16.msra.mxu0 0
    %591 = vmatpush.bf16.msra.mxu0 0
    %592 = vmatpush.bf16.msra.mxu0 %v583
    %593 = vmatmul.bf16.gmra.mxu0 %v580
    %v594 = vpop.f32.mrf.mxu0
    %v595 = vadd.f32 0.0, %v594
    %v596 = vpop.f32.mrf.mxu0
    %597 = vdwg.mxu0
    %v599 = vsel %vm323, %v554, 0
    %v602 = vsel %vm472, %v558, 0
    %604 = vmatpush.bf16.msra.mxu0 0
    %605 = vmatpush.bf16.msra.mxu0 0
    %606 = vmatpush.bf16.msra.mxu0 0
    %607 = vmatpush.bf16.msra.mxu0 0
    %608 = vmatpush.bf16.msra.mxu0 0
    %609 = vmatpush.bf16.msra.mxu0 0
    %610 = vmatpush.bf16.msra.mxu0 0
    %611 = vmatpush.bf16.msra.mxu0 %v602
    %612 = vmatmul.bf16.gmra.mxu0 %v599
    %v613 = vpop.f32.mrf.mxu0
    %v614 = vadd.f32 0.0, %v613
    %v615 = vpop.f32.mrf.mxu0
    %616 = vdwg.mxu0
    %v618 = vsel %vm323, %v555, 0
    %v621 = vsel %vm472, %v559, 0
    %623 = vmatpush.bf16.msra.mxu0 0
    %624 = vmatpush.bf16.msra.mxu0 0
    %625 = vmatpush.bf16.msra.mxu0 0
    %626 = vmatpush.bf16.msra.mxu0 0
    %627 = vmatpush.bf16.msra.mxu0 0
    %628 = vmatpush.bf16.msra.mxu0 0
    %629 = vmatpush.bf16.msra.mxu0 0
    %630 = vmatpush.bf16.msra.mxu0 %v621
    %631 = vmatmul.bf16.gmra.mxu0 %v618
    %v632 = vpop.f32.mrf.mxu0
    %v633 = vadd.f32 0.0, %v632
    %v634 = vpop.f32.mrf.mxu0
    %635 = vdwg.mxu0
    %v636 = vsel %vm107, %v576, 0.0
    %v637 = vsel %vm107, %v595, 0.0
    %v638 = vadd.f32 %v636, %v637
    %v639 = vsel %vm107, %v614, 0.0
    %v640 = vadd.f32 %v638, %v639
    %v641 = vsel %vm107, %v633, 0.0
    %v642 = vadd.f32 %v640, %v641
    %v644 = vsel %vm107, %v170, 0
    %646 = vmatpush.bf16.msra.mxu0 0
    %647 = vmatpush.bf16.msra.mxu0 0
    %648 = vmatpush.bf16.msra.mxu0 0
    %649 = vmatpush.bf16.msra.mxu0 0
    %650 = vmatpush.bf16.msra.mxu0 0
    %651 = vmatpush.bf16.msra.mxu0 0
    %652 = vmatpush.bf16.msra.mxu0 %v196
    %653 = vmatpush.bf16.msra.mxu0 %v195
    %654 = vmatmul.bf16.gmra.mxu0 %v644
    %v655 = vpop.f32.mrf.mxu0
    %v656 = vadd.f32 0.0, %v655
    %v657 = vpop.f32.mrf.mxu0
    %658 = vdwg.mxu0
    %659 = vmatpush.bf16.msra.mxu0 0
    %660 = vmatpush.bf16.msra.mxu0 0
    %661 = vmatpush.bf16.msra.mxu0 0
    %662 = vmatpush.bf16.msra.mxu0 0
    %663 = vmatpush.bf16.msra.mxu0 0
    %664 = vmatpush.bf16.msra.mxu0 0
    %665 = vmatpush.bf16.msra.mxu0 %v224
    %666 = vmatpush.bf16.msra.mxu0 %v223
    %667 = vmatmul.bf16.gmra.mxu0 %v644
    %v668 = vpop.f32.mrf.mxu0
    %v669 = vadd.f32 0.0, %v668
    %v670 = vpop.f32.mrf.mxu0
    %671 = vdwg.mxu0
    %672 = vmatpush.bf16.msra.mxu0 0
    %673 = vmatpush.bf16.msra.mxu0 0
    %674 = vmatpush.bf16.msra.mxu0 0
    %675 = vmatpush.bf16.msra.mxu0 0
    %676 = vmatpush.bf16.msra.mxu0 0
    %677 = vmatpush.bf16.msra.mxu0 0
    %678 = vmatpush.bf16.msra.mxu0 %v249
    %679 = vmatpush.bf16.msra.mxu0 %v248
    %680 = vmatmul.bf16.gmra.mxu0 %v644
    %v681 = vpop.f32.mrf.mxu0
    %v682 = vadd.f32 0.0, %v681
    %v683 = vpop.f32.mrf.mxu0
    %684 = vdwg.mxu0
    %685 = vmatpush.bf16.msra.mxu0 0
    %686 = vmatpush.bf16.msra.mxu0 0
    %687 = vmatpush.bf16.msra.mxu0 0
    %688 = vmatpush.bf16.msra.mxu0 0
    %689 = vmatpush.bf16.msra.mxu0 0
    %690 = vmatpush.bf16.msra.mxu0 0
    %691 = vmatpush.bf16.msra.mxu0 %v274
    %692 = vmatpush.bf16.msra.mxu0 %v273
    %693 = vmatmul.bf16.gmra.mxu0 %v644
    %v694 = vpop.f32.mrf.mxu0
    %v695 = vadd.f32 0.0, %v694
    %v696 = vpop.f32.mrf.mxu0
    %697 = vdwg.mxu0
    %v698 = vadd.f32 %v656, %v298
    %v699 = vadd.f32 %v669, %v299
    %v700 = vadd.f32 %v682, %v300
    %v701 = vadd.f32 %v695, %v301
    %v702 = vpack.c.bf16 %v698, %v698
    %v703 = vpack.c.bf16 %v699, %v699
    %v704 = vpack.c.bf16 %v700, %v700
    %v705 = vpack.c.bf16 %v701, %v701
    %v706 = vpack.c.bf16 %v656, %v656
    %v707 = vpack.c.bf16 %v669, %v669
    %v708 = vpack.c.bf16 %v682, %v682
    %v709 = vpack.c.bf16 %v695, %v695
    %v711 = vunpack.c.l.b16 %v706
    %v712 = vpack.c.b16 %v711, %v711
    %713 = vrot.lane.b32.xlu0 %v712, 120
    %v714 = vpop.permute.xlu0 %713
    %v716 = vsel %vm323, %v702, 0
    %v719 = vsel %vm323, %v714, 0
    %721 = vmatpush.bf16.xpose.msra.mxu0 0
    %722 = vmatpush.bf16.xpose.msra.mxu0 0
    %723 = vmatpush.bf16.xpose.msra.mxu0 0
    %724 = vmatpush.bf16.xpose.msra.mxu0 0
    %725 = vmatpush.bf16.xpose.msra.mxu0 0
    %726 = vmatpush.bf16.xpose.msra.mxu0 0
    %727 = vmatpush.bf16.xpose.msra.mxu0 0
    %728 = vmatpush.bf16.xpose.msra.mxu0 %v719
    %729 = vmatmul.bf16.gmra.mxu0 %v716
    %v730 = vpop.f32.mrf.mxu0
    %v731 = vadd.f32 0.0, %v730
    %v732 = vpop.f32.mrf.mxu0
    %733 = vdwg.mxu0
    %v735 = vunpack.c.l.b16 %v707
    %v736 = vpack.c.b16 %v735, %v735
    %737 = vrot.lane.b32.xlu0 %v736, 120
    %v738 = vpop.permute.xlu0 %737
    %v740 = vsel %vm323, %v703, 0
    %v743 = vsel %vm323, %v738, 0
    %745 = vmatpush.bf16.xpose.msra.mxu0 0
    %746 = vmatpush.bf16.xpose.msra.mxu0 0
    %747 = vmatpush.bf16.xpose.msra.mxu0 0
    %748 = vmatpush.bf16.xpose.msra.mxu0 0
    %749 = vmatpush.bf16.xpose.msra.mxu0 0
    %750 = vmatpush.bf16.xpose.msra.mxu0 0
    %751 = vmatpush.bf16.xpose.msra.mxu0 0
    %752 = vmatpush.bf16.xpose.msra.mxu0 %v743
    %753 = vmatmul.bf16.gmra.mxu0 %v740
    %v754 = vpop.f32.mrf.mxu0
    %v755 = vadd.f32 0.0, %v754
    %v756 = vpop.f32.mrf.mxu0
    %757 = vdwg.mxu0
    %v759 = vunpack.c.l.b16 %v708
    %v760 = vpack.c.b16 %v759, %v759
    %761 = vrot.lane.b32.xlu0 %v760, 120
    %v762 = vpop.permute.xlu0 %761
    %v764 = vsel %vm323, %v704, 0
    %v767 = vsel %vm323, %v762, 0
    %769 = vmatpush.bf16.xpose.msra.mxu0 0
    %770 = vmatpush.bf16.xpose.msra.mxu0 0
    %771 = vmatpush.bf16.xpose.msra.mxu0 0
    %772 = vmatpush.bf16.xpose.msra.mxu0 0
    %773 = vmatpush.bf16.xpose.msra.mxu0 0
    %774 = vmatpush.bf16.xpose.msra.mxu0 0
    %775 = vmatpush.bf16.xpose.msra.mxu0 0
    %776 = vmatpush.bf16.xpose.msra.mxu0 %v767
    %777 = vmatmul.bf16.gmra.mxu0 %v764
    %v778 = vpop.f32.mrf.mxu0
    %v779 = vadd.f32 0.0, %v778
    %v780 = vpop.f32.mrf.mxu0
    %781 = vdwg.mxu0
    %v783 = vunpack.c.l.b16 %v709
    %v784 = vpack.c.b16 %v783, %v783
    %785 = vrot.lane.b32.xlu0 %v784, 120
    %v786 = vpop.permute.xlu0 %785
    %v788 = vsel %vm323, %v705, 0
    %v791 = vsel %vm323, %v786, 0
    %793 = vmatpush.bf16.xpose.msra.mxu0 0
    %794 = vmatpush.bf16.xpose.msra.mxu0 0
    %795 = vmatpush.bf16.xpose.msra.mxu0 0
    %796 = vmatpush.bf16.xpose.msra.mxu0 0
    %797 = vmatpush.bf16.xpose.msra.mxu0 0
    %798 = vmatpush.bf16.xpose.msra.mxu0 0
    %799 = vmatpush.bf16.xpose.msra.mxu0 0
    %800 = vmatpush.bf16.xpose.msra.mxu0 %v791
    %801 = vmatmul.bf16.gmra.mxu0 %v788
    %v802 = vpop.f32.mrf.mxu0
    %v803 = vadd.f32 0.0, %v802
    %v804 = vpop.f32.mrf.mxu0
    %805 = vdwg.mxu0
    %v806 = vmul.f32 %v731, 0.35355338
    %v807 = vmul.f32 %v755, 0.35355338
    %v808 = vmul.f32 %v779, 0.35355338
    %v809 = vmul.f32 %v803, 0.35355338
    %v810 = vsel %vm323, %v806, -inf
    %811 = vmax.xlane.f32.xlu0 %v810
    %v812 = vpop.xlane.xlu0 %811
    %v813 = vsel %vm323, %v807, -inf
    %814 = vmax.xlane.f32.xlu0 %v813
    %v815 = vpop.xlane.xlu0 %814
    %v816 = vsel %vm323, %v808, -inf
    %817 = vmax.xlane.f32.xlu0 %v816
    %v818 = vpop.xlane.xlu0 %817
    %v819 = vsel %vm323, %v809, -inf
    %820 = vmax.xlane.f32.xlu0 %v819
    %v821 = vpop.xlane.xlu0 %820
    %v822 = vsub.f32 %v806, %v812
    %v823 = vsub.f32 %v807, %v815
    %v824 = vsub.f32 %v808, %v818
    %v825 = vsub.f32 %v809, %v821
    %v826 = vmul.f32 %v822, 1.442695
    %v827 = vpow.pop %v826
    %v828 = vmul.f32 %v823, 1.442695
    %v829 = vpow.pop %v828
    %v830 = vmul.f32 %v824, 1.442695
    %v831 = vpow.pop %v830
    %v832 = vmul.f32 %v825, 1.442695
    %v833 = vpow.pop %v832
    %v834 = vsel %vm323, %v827, 0.0
    %835 = vadd.xlane.f32.xlu0 %v834
    %v836 = vpop.xlane.xlu0 %835
    %v837 = vsel %vm323, %v829, 0.0
    %838 = vadd.xlane.f32.xlu0 %v837
    %v839 = vpop.xlane.xlu0 %838
    %v840 = vsel %vm323, %v831, 0.0
    %841 = vadd.xlane.f32.xlu0 %v840
    %v842 = vpop.xlane.xlu0 %841
    %v843 = vsel %vm323, %v833, 0.0
    %844 = vadd.xlane.f32.xlu0 %v843
    %v845 = vpop.xlane.xlu0 %844
    %v846 = vrcp.pop %v836
    %v847 = vrcp.pop %v839
    %v848 = vrcp.pop %v842
    %v849 = vrcp.pop %v845
    %v850 = vmul.f32 %v827, %v846
    %v851 = vmul.f32 %v829, %v847
    %v852 = vmul.f32 %v831, %v848
    %v853 = vmul.f32 %v833, %v849
    %v854 = vpack.c.bf16 %v850, %v850
    %v855 = vpack.c.bf16 %v851, %v851
    %v856 = vpack.c.bf16 %v852, %v852
    %v857 = vpack.c.bf16 %v853, %v853
    %858 = vrot.lane.b32.xlu0 %v712, 112
    %v859 = vpop.permute.xlu0 %858
    %v861 = vsel %vm323, %v854, 0
    %v864 = vsel %vm472, %v859, 0
    %866 = vmatpush.bf16.msra.mxu0 0
    %867 = vmatpush.bf16.msra.mxu0 0
    %868 = vmatpush.bf16.msra.mxu0 0
    %869 = vmatpush.bf16.msra.mxu0 0
    %870 = vmatpush.bf16.msra.mxu0 0
    %871 = vmatpush.bf16.msra.mxu0 0
    %872 = vmatpush.bf16.msra.mxu0 0
    %873 = vmatpush.bf16.msra.mxu0 %v864
    %874 = vmatmul.bf16.gmra.mxu0 %v861
    %v875 = vpop.f32.mrf.mxu0
    %v876 = vadd.f32 0.0, %v875
    %v877 = vpop.f32.mrf.mxu0
    %878 = vdwg.mxu0
    %879 = vrot.lane.b32.xlu0 %v736, 112
    %v880 = vpop.permute.xlu0 %879
    %v882 = vsel %vm323, %v855, 0
    %v885 = vsel %vm472, %v880, 0
    %887 = vmatpush.bf16.msra.mxu0 0
    %888 = vmatpush.bf16.msra.mxu0 0
    %889 = vmatpush.bf16.msra.mxu0 0
    %890 = vmatpush.bf16.msra.mxu0 0
    %891 = vmatpush.bf16.msra.mxu0 0
    %892 = vmatpush.bf16.msra.mxu0 0
    %893 = vmatpush.bf16.msra.mxu0 0
    %894 = vmatpush.bf16.msra.mxu0 %v885
    %895 = vmatmul.bf16.gmra.mxu0 %v882
    %v896 = vpop.f32.mrf.mxu0
    %v897 = vadd.f32 0.0, %v896
    %v898 = vpop.f32.mrf.mxu0
    %899 = vdwg.mxu0
    %900 = vrot.lane.b32.xlu0 %v760, 112
    %v901 = vpop.permute.xlu0 %900
    %v903 = vsel %vm323, %v856, 0
    %v906 = vsel %vm472, %v901, 0
    %908 = vmatpush.bf16.msra.mxu0 0
    %909 = vmatpush.bf16.msra.mxu0 0
    %910 = vmatpush.bf16.msra.mxu0 0
    %911 = vmatpush.bf16.msra.mxu0 0
    %912 = vmatpush.bf16.msra.mxu0 0
    %913 = vmatpush.bf16.msra.mxu0 0
    %914 = vmatpush.bf16.msra.mxu0 0
    %915 = vmatpush.bf16.msra.mxu0 %v906
    %916 = vmatmul.bf16.gmra.mxu0 %v903
    %v917 = vpop.f32.mrf.mxu0
    %v918 = vadd.f32 0.0, %v917
    %v919 = vpop.f32.mrf.mxu0
    %920 = vdwg.mxu0
    %921 = vrot.lane.b32.xlu0 %v784, 112
    %v922 = vpop.permute.xlu0 %921
    %v924 = vsel %vm323, %v857, 0
    %v927 = vsel %vm472, %v922, 0
    %929 = vmatpush.bf16.msra.mxu0 0
    %930 = vmatpush.bf16.msra.mxu0 0
    %931 = vmatpush.bf16.msra.mxu0 0
    %932 = vmatpush.bf16.msra.mxu0 0
    %933 = vmatpush.bf16.msra.mxu0 0
    %934 = vmatpush.bf16.msra.mxu0 0
    %935 = vmatpush.bf16.msra.mxu0 0
    %936 = vmatpush.bf16.msra.mxu0 %v927
    %937 = vmatmul.bf16.gmra.mxu0 %v924
    %v938 = vpop.f32.mrf.mxu0
    %v939 = vadd.f32 0.0, %v938
    %v940 = vpop.f32.mrf.mxu0
    %941 = vdwg.mxu0
    %v942 = vpack.c.bf16 %v876, %v876
    %v943 = vpack.c.bf16 %v897, %v897
    %v944 = vpack.c.bf16 %v918, %v918
    %v945 = vpack.c.bf16 %v939, %v939
    %v947 = vsel %vm323, %v942, 0
    %949 = vmatpush.bf16.msra.mxu0 0
    %950 = vmatpush.bf16.msra.mxu0 0
    %951 = vmatpush.bf16.msra.mxu0 0
    %952 = vmatpush.bf16.msra.mxu0 0
    %953 = vmatpush.bf16.msra.mxu0 0
    %954 = vmatpush.bf16.msra.mxu0 0
    %955 = vmatpush.bf16.msra.mxu0 0
    %956 = vmatpush.bf16.msra.mxu0 %v564
    %957 = vmatmul.bf16.gmra.mxu0 %v947
    %v958 = vpop.f32.mrf.mxu0
    %v959 = vadd.f32 0.0, %v958
    %v960 = vpop.f32.mrf.mxu0
    %961 = vdwg.mxu0
    %v963 = vsel %vm323, %v943, 0
    %965 = vmatpush.bf16.msra.mxu0 0
    %966 = vmatpush.bf16.msra.mxu0 0
    %967 = vmatpush.bf16.msra.mxu0 0
    %968 = vmatpush.bf16.msra.mxu0 0
    %969 = vmatpush.bf16.msra.mxu0 0
    %970 = vmatpush.bf16.msra.mxu0 0
    %971 = vmatpush.bf16.msra.mxu0 0
    %972 = vmatpush.bf16.msra.mxu0 %v583
    %973 = vmatmul.bf16.gmra.mxu0 %v963
    %v974 = vpop.f32.mrf.mxu0
    %v975 = vadd.f32 0.0, %v974
    %v976 = vpop.f32.mrf.mxu0
    %977 = vdwg.mxu0
    %v979 = vsel %vm323, %v944, 0
    %981 = vmatpush.bf16.msra.mxu0 0
    %982 = vmatpush.bf16.msra.mxu0 0
    %983 = vmatpush.bf16.msra.mxu0 0
    %984 = vmatpush.bf16.msra.mxu0 0
    %985 = vmatpush.bf16.msra.mxu0 0
    %986 = vmatpush.bf16.msra.mxu0 0
    %987 = vmatpush.bf16.msra.mxu0 0
    %988 = vmatpush.bf16.msra.mxu0 %v602
    %989 = vmatmul.bf16.gmra.mxu0 %v979
    %v990 = vpop.f32.mrf.mxu0
    %v991 = vadd.f32 0.0, %v990
    %v992 = vpop.f32.mrf.mxu0
    %993 = vdwg.mxu0
    %v995 = vsel %vm323, %v945, 0
    %997 = vmatpush.bf16.msra.mxu0 0
    %998 = vmatpush.bf16.msra.mxu0 0
    %999 = vmatpush.bf16.msra.mxu0 0
    %1000 = vmatpush.bf16.msra.mxu0 0
    %1001 = vmatpush.bf16.msra.mxu0 0
    %1002 = vmatpush.bf16.msra.mxu0 0
    %1003 = vmatpush.bf16.msra.mxu0 0
    %1004 = vmatpush.bf16.msra.mxu0 %v621
    %1005 = vmatmul.bf16.gmra.mxu0 %v995
    %v1006 = vpop.f32.mrf.mxu0
    %v1007 = vadd.f32 0.0, %v1006
    %v1008 = vpop.f32.mrf.mxu0
    %1009 = vdwg.mxu0
    %v1010 = vsel %vm107, %v959, 0.0
    %v1011 = vsel %vm107, %v975, 0.0
    %v1012 = vadd.f32 %v1010, %v1011
    %v1013 = vsel %vm107, %v991, 0.0
    %v1014 = vadd.f32 %v1012, %v1013
    %v1015 = vsel %vm107, %v1007, 0.0
    %v1016 = vadd.f32 %v1014, %v1015
    %v1017 = vld [vmem:[%s9 + $0x2] sm:$0x1]
    %v1018 = vperm.slane %v1017, 0
    %v1019 = vadd.f32 %v642, %v1018
    %v1020 = vadd.f32 %v1016, %v1018
    %v1021 = vadd.f32 %v167, %v1019
    %v1022 = vadd.f32 %v168, %v1020
    %v1023 = vld [vmem:[%s9 + $0x3] sm:$0x1]
    %v1024 = vld [vmem:[%s9 + $0x4] sm:$0x1]
    %v1025 = vsel %vm107, %v1021, 0.0
    %1026 = vadd.xlane.f32.xlu0 %v1025
    %v1027 = vpop.xlane.xlu0 %1026
    %v1028 = vsel %vm107, %v1022, 0.0
    %1029 = vadd.xlane.f32.xlu0 %v1028
    %v1030 = vpop.xlane.xlu0 %1029
    %v1031 = vmul.f32 %v1027, %v120
    %v1032 = vmul.f32 %v1030, %v120
    %v1033 = vmul.f32 %v1021, %v1021
    %v1034 = vmul.f32 %v1022, %v1022
    %v1035 = vsel %vm107, %v1033, 0.0
    %1036 = vadd.xlane.f32.xlu0 %v1035
    %v1037 = vpop.xlane.xlu0 %1036
    %v1038 = vsel %vm107, %v1034, 0.0
    %1039 = vadd.xlane.f32.xlu0 %v1038
    %v1040 = vpop.xlane.xlu0 %1039
    %v1041 = vmul.f32 %v1037, %v120
    %v1042 = vmul.f32 %v1040, %v120
    %v1043 = vmul.f32 %v1031, %v1031
    %v1044 = vmul.f32 %v1032, %v1032
    %v1045 = vsub.f32 %v1041, %v1043
    %v1046 = vsub.f32 %v1042, %v1044
    %v1047 = vsub.f32 %v1021, %v1031
    %v1048 = vsub.f32 %v1022, %v1032
    %v1049 = vadd.f32 %v1045, 1e-12
    %v1050 = vadd.f32 %v1046, 1e-12
    %v1051 = vrsqrt.pop %v1049
    %v1052 = vmul.f32 %v1051, %v1049
    %v1053 = vmul.f32 %v1052, %v1051
    %v1054 = vmul.f32 0.5, %v1053
    %v1055 = vsub.f32 1.5, %v1054
    %v1056 = vmul.f32 %v1051, %v1055
    %vm1057 = vweird.f32 %v1049
    %vm1058 = vweird.f32 %v1051
    %vm1059 = vmor %vm1057, %vm1058
    %v1060 = vsel %vm1059, %v1051, %v1056
    %v1061 = vrsqrt.pop %v1050
    %v1062 = vmul.f32 %v1061, %v1050
    %v1063 = vmul.f32 %v1062, %v1061
    %v1064 = vmul.f32 0.5, %v1063
    %v1065 = vsub.f32 1.5, %v1064
    %v1066 = vmul.f32 %v1061, %v1065
    %vm1067 = vweird.f32 %v1050
    %vm1068 = vweird.f32 %v1061
    %vm1069 = vmor %vm1067, %vm1068
    %v1070 = vsel %vm1069, %v1061, %v1066
    %v1071 = vmul.f32 %v1047, %v1060
    %v1072 = vmul.f32 %v1048, %v1070
    %v1073 = vperm.slane %v1023, 0
    %v1074 = vmul.f32 %v1071, %v1073
    %v1075 = vmul.f32 %v1072, %v1073
    %v1076 = vperm.slane %v1024, 0
    %v1077 = vadd.f32 %v1074, %v1076
    %v1078 = vadd.f32 %v1075, %v1076
    %v1079 = vpack.c.bf16 %v1078, %v1077
    %v1080 = vld [vmem:[%s6] sm:$0xf]
    %v1081 = vld [vmem:[%s6 + $0x4] sm:$0xf]
    %v1082 = vld [vmem:[%s6 + $0x8] sm:$0xf]
    %v1083 = vld [vmem:[%s6 + $0xc] sm:$0xf]
    %v1084 = vld [vmem:[%s9 + $0x5] sm:$0x1]
    %v1085 = vperm.slane %v1084, 0
    %v1090 = vunpack.c.l.b16 %v1080
    %v1091 = vunpack.c.l.b16 %v1081
    %v1092 = vunpack.c.l.b16 %v1082
    %v1093 = vunpack.c.l.b16 %v1083
    %v1094 = vpack.c.b16 %v1091, %v1090
    %v1095 = vpack.c.b16 %v1093, %v1092
    %v1099 = vsel %vm107, %v1079, 0
    %1101 = vmatpush.bf16.msra.mxu0 0
    %1102 = vmatpush.bf16.msra.mxu0 0
    %1103 = vmatpush.bf16.msra.mxu0 0
    %1104 = vmatpush.bf16.msra.mxu0 0
    %1105 = vmatpush.bf16.msra.mxu0 0
    %1106 = vmatpush.bf16.msra.mxu0 0
    %1107 = vmatpush.bf16.msra.mxu0 %v1095
    %1108 = vmatpush.bf16.msra.mxu0 %v1094
    %1109 = vmatmul.bf16.gmra.mxu0 %v1099
    %v1110 = vpop.f32.mrf.mxu0
    %v1111 = vadd.f32 %v1085, %v1110
    %v1112 = vpop.f32.mrf.mxu0
    %v1113 = vadd.f32 %v1085, %v1112
    %1114 = vdwg.mxu0
    %v1115 = vmul.f32 %v1111, %v1111
    %v1116 = vmul.f32 %v1113, %v1113
    %v1117 = vmul.f32 %v1111, %v1115
    %v1118 = vmul.f32 %v1113, %v1116
    %v1119 = vmul.f32 %v1117, 0.044715
    %v1120 = vmul.f32 %v1118, 0.044715
    %v1121 = vadd.f32 %v1111, %v1119
    %v1122 = vadd.f32 %v1113, %v1120
    %v1123 = vmul.f32 %v1121, 0.7978846
    %v1124 = vmul.f32 %v1122, 0.7978846
    %v1125 = vtanh.pop %v1123
    %v1126 = vtanh.pop %v1124
    %v1127 = vadd.f32 %v1125, 1.0
    %v1128 = vadd.f32 %v1126, 1.0
    %v1129 = vmul.f32 %v1127, 0.5
    %v1130 = vmul.f32 %v1128, 0.5
    %v1131 = vmul.f32 %v1111, %v1129
    %v1132 = vmul.f32 %v1113, %v1130
    %v1133 = vpack.c.bf16 %v1132, %v1131
    %v1134 = vld [vmem:[%s7] sm:$0xf]
    %v1135 = vld [vmem:[%s7 + $0x4] sm:$0xf]
    %v1136 = vld [vmem:[%s7 + $0x8] sm:$0xf]
    %v1137 = vld [vmem:[%s7 + $0xc] sm:$0xf]
    %v1138 = vld [vmem:[%s7 + $0x10] sm:$0xf]
    %v1139 = vld [vmem:[%s7 + $0x14] sm:$0xf]
    %v1140 = vld [vmem:[%s7 + $0x18] sm:$0xf]
    %v1141 = vld [vmem:[%s7 + $0x1c] sm:$0xf]
    %v1142 = vld [vmem:[%s9 + $0x6] sm:$0x1]
    %v1143 = vperm.slane %v1142, 0
    %v1152 = vunpack.c.l.b16 %v1134
    %v1153 = vunpack.c.l.b16 %v1135
    %v1154 = vunpack.c.l.b16 %v1136
    %v1155 = vunpack.c.l.b16 %v1137
    %v1156 = vunpack.c.l.b16 %v1138
    %v1157 = vunpack.c.l.b16 %v1139
    %v1158 = vunpack.c.l.b16 %v1140
    %v1159 = vunpack.c.l.b16 %v1141
    %v1160 = vpack.c.b16 %v1153, %v1152
    %v1161 = vpack.c.b16 %v1155, %v1154
    %v1162 = vpack.c.b16 %v1157, %v1156
    %v1163 = vpack.c.b16 %v1159, %v1158
    %v1169 = vsel %vm87, %v1133, 0
    %1171 = vmatpush.bf16.msra.mxu0 0
    %1172 = vmatpush.bf16.msra.mxu0 0
    %1173 = vmatpush.bf16.msra.mxu0 0
    %1174 = vmatpush.bf16.msra.mxu0 0
    %1175 = vmatpush.bf16.msra.mxu0 %v1163
    %1176 = vmatpush.bf16.msra.mxu0 %v1162
    %1177 = vmatpush.bf16.msra.mxu0 %v1161
    %1178 = vmatpush.bf16.msra.mxu0 %v1160
    %1179 = vmatmul.bf16.gmra.mxu0 %v1169
    %v1180 = vpop.f32.mrf.mxu0
    %v1181 = vadd.f32 %v1143, %v1180
    %v1182 = vpop.f32.mrf.mxu0
    %v1183 = vadd.f32 %v1143, %v1182
    %1184 = vdwg.mxu0
    %v1185 = vadd.f32 %v1077, %v1181
    %v1186 = vadd.f32 %v1078, %v1183
    %v1187 = vld [vmem:[%s9 + $0x7] sm:$0x1]
    %v1188 = vld [vmem:[%s9 + $0x8] sm:$0x1]
    %v1189 = vsel %vm107, %v1185, 0.0
    %1190 = vadd.xlane.f32.xlu0 %v1189
    %v1191 = vpop.xlane.xlu0 %1190
    %v1192 = vsel %vm107, %v1186, 0.0
    %1193 = vadd.xlane.f32.xlu0 %v1192
    %v1194 = vpop.xlane.xlu0 %1193
    %v1195 = vmul.f32 %v1191, %v120
    %v1196 = vmul.f32 %v1194, %v120
    %v1197 = vmul.f32 %v1185, %v1185
    %v1198 = vmul.f32 %v1186, %v1186
    %v1199 = vsel %vm107, %v1197, 0.0
    %1200 = vadd.xlane.f32.xlu0 %v1199
    %v1201 = vpop.xlane.xlu0 %1200
    %v1202 = vsel %vm107, %v1198, 0.0
    %1203 = vadd.xlane.f32.xlu0 %v1202
    %v1204 = vpop.xlane.xlu0 %1203
    %v1205 = vmul.f32 %v1201, %v120
    %v1206 = vmul.f32 %v1204, %v120
    %v1207 = vmul.f32 %v1195, %v1195
    %v1208 = vmul.f32 %v1196, %v1196
    %v1209 = vsub.f32 %v1205, %v1207
    %v1210 = vsub.f32 %v1206, %v1208
    %v1211 = vsub.f32 %v1185, %v1195
    %v1212 = vsub.f32 %v1186, %v1196
    %v1213 = vadd.f32 %v1209, 1e-12
    %v1214 = vadd.f32 %v1210, 1e-12
    %v1215 = vrsqrt.pop %v1213
    %v1216 = vmul.f32 %v1215, %v1213
    %v1217 = vmul.f32 %v1216, %v1215
    %v1218 = vmul.f32 0.5, %v1217
    %v1219 = vsub.f32 1.5, %v1218
    %v1220 = vmul.f32 %v1215, %v1219
    %vm1221 = vweird.f32 %v1213
    %vm1222 = vweird.f32 %v1215
    %vm1223 = vmor %vm1221, %vm1222
    %v1224 = vsel %vm1223, %v1215, %v1220
    %v1225 = vrsqrt.pop %v1214
    %v1226 = vmul.f32 %v1225, %v1214
    %v1227 = vmul.f32 %v1226, %v1225
    %v1228 = vmul.f32 0.5, %v1227
    %v1229 = vsub.f32 1.5, %v1228
    %v1230 = vmul.f32 %v1225, %v1229
    %vm1231 = vweird.f32 %v1214
    %vm1232 = vweird.f32 %v1225
    %vm1233 = vmor %vm1231, %vm1232
    %v1234 = vsel %vm1233, %v1225, %v1230
    %v1235 = vmul.f32 %v1211, %v1224
    %v1236 = vmul.f32 %v1212, %v1234
    %v1237 = vperm.slane %v1187, 0
    %v1238 = vmul.f32 %v1235, %v1237
    %v1239 = vmul.f32 %v1236, %v1237
    %v1240 = vperm.slane %v1188, 0
    %v1241 = vadd.f32 %v1238, %v1240
    %v1242 = vadd.f32 %v1239, %v1240
    %v1243 = vpack.c.bf16 %v1241, %v1241
    %v1244 = vpack.c.bf16 %v1242, %v1242
    %s1245 = scalar_lea.vmem %s3, 64
    %v1246 = vld [vmem:[%s1245] sm:$0xf]
    %v1247 = vld [vmem:[%s1245 + $0x4] sm:$0xf]
    %v1248 = vld [vmem:[%s1245 + $0x8] sm:$0xf]
    %v1249 = vld [vmem:[%s1245 + $0xc] sm:$0xf]
    %v1250 = vld [vmem:[%s1245 + $0x10] sm:$0xf]
    %v1251 = vld [vmem:[%s1245 + $0x14] sm:$0xf]
    %v1252 = vld [vmem:[%s1245 + $0x18] sm:$0xf]
    %v1253 = vld [vmem:[%s1245 + $0x1c] sm:$0xf]
    %v1254 = vld [vmem:[%s1245 + $0x20] sm:$0xf]
    %v1255 = vld [vmem:[%s1245 + $0x24] sm:$0xf]
    %v1256 = vld [vmem:[%s1245 + $0x28] sm:$0xf]
    %v1257 = vld [vmem:[%s1245 + $0x2c] sm:$0xf]
    %v1258 = vld [vmem:[%s1245 + $0x30] sm:$0xf]
    %v1259 = vld [vmem:[%s1245 + $0x34] sm:$0xf]
    %v1260 = vld [vmem:[%s1245 + $0x38] sm:$0xf]
    %v1261 = vld [vmem:[%s1245 + $0x3c] sm:$0xf]
    %v1266 = vunpack.c.l.b16 %v1246
    %v1267 = vunpack.c.l.b16 %v1247
    %v1268 = vunpack.c.l.b16 %v1248
    %v1269 = vunpack.c.l.b16 %v1249
    %v1270 = vpack.c.b16 %v1267, %v1266
    %v1271 = vpack.c.b16 %v1269, %v1268
    %v1275 = vsel %vm107, %v1243, 0
    %1277 = vmatpush.bf16.msra.mxu0 0
    %1278 = vmatpush.bf16.msra.mxu0 0
    %1279 = vmatpush.bf16.msra.mxu0 0
    %1280 = vmatpush.bf16.msra.mxu0 0
    %1281 = vmatpush.bf16.msra.mxu0 0
    %1282 = vmatpush.bf16.msra.mxu0 0
    %1283 = vmatpush.bf16.msra.mxu0 %v1271
    %1284 = vmatpush.bf16.msra.mxu0 %v1270
    %1285 = vmatmul.bf16.gmra.mxu0 %v1275
    %v1286 = vpop.f32.mrf.mxu0
    %v1287 = vadd.f32 0.0, %v1286
    %v1288 = vpop.f32.mrf.mxu0
    %1289 = vdwg.mxu0
    %v1294 = vunpack.c.l.b16 %v1250
    %v1295 = vunpack.c.l.b16 %v1251
    %v1296 = vunpack.c.l.b16 %v1252
    %v1297 = vunpack.c.l.b16 %v1253
    %v1298 = vpack.c.b16 %v1295, %v1294
    %v1299 = vpack.c.b16 %v1297, %v1296
    %1302 = vmatpush.bf16.msra.mxu0 0
    %1303 = vmatpush.bf16.msra.mxu0 0
    %1304 = vmatpush.bf16.msra.mxu0 0
    %1305 = vmatpush.bf16.msra.mxu0 0
    %1306 = vmatpush.bf16.msra.mxu0 0
    %1307 = vmatpush.bf16.msra.mxu0 0
    %1308 = vmatpush.bf16.msra.mxu0 %v1299
    %1309 = vmatpush.bf16.msra.mxu0 %v1298
    %1310 = vmatmul.bf16.gmra.mxu0 %v1275
    %v1311 = vpop.f32.mrf.mxu0
    %v1312 = vadd.f32 0.0, %v1311
    %v1313 = vpop.f32.mrf.mxu0
    %1314 = vdwg.mxu0
    %v1319 = vunpack.c.l.b16 %v1254
    %v1320 = vunpack.c.l.b16 %v1255
    %v1321 = vunpack.c.l.b16 %v1256
    %v1322 = vunpack.c.l.b16 %v1257
    %v1323 = vpack.c.b16 %v1320, %v1319
    %v1324 = vpack.c.b16 %v1322, %v1321
    %1327 = vmatpush.bf16.msra.mxu0 0
    %1328 = vmatpush.bf16.msra.mxu0 0
    %1329 = vmatpush.bf16.msra.mxu0 0
    %1330 = vmatpush.bf16.msra.mxu0 0
    %1331 = vmatpush.bf16.msra.mxu0 0
    %1332 = vmatpush.bf16.msra.mxu0 0
    %1333 = vmatpush.bf16.msra.mxu0 %v1324
    %1334 = vmatpush.bf16.msra.mxu0 %v1323
    %1335 = vmatmul.bf16.gmra.mxu0 %v1275
    %v1336 = vpop.f32.mrf.mxu0
    %v1337 = vadd.f32 0.0, %v1336
    %v1338 = vpop.f32.mrf.mxu0
    %1339 = vdwg.mxu0
    %v1344 = vunpack.c.l.b16 %v1258
    %v1345 = vunpack.c.l.b16 %v1259
    %v1346 = vunpack.c.l.b16 %v1260
    %v1347 = vunpack.c.l.b16 %v1261
    %v1348 = vpack.c.b16 %v1345, %v1344
    %v1349 = vpack.c.b16 %v1347, %v1346
    %1352 = vmatpush.bf16.msra.mxu0 0
    %1353 = vmatpush.bf16.msra.mxu0 0
    %1354 = vmatpush.bf16.msra.mxu0 0
    %1355 = vmatpush.bf16.msra.mxu0 0
    %1356 = vmatpush.bf16.msra.mxu0 0
    %1357 = vmatpush.bf16.msra.mxu0 0
    %1358 = vmatpush.bf16.msra.mxu0 %v1349
    %1359 = vmatpush.bf16.msra.mxu0 %v1348
    %1360 = vmatmul.bf16.gmra.mxu0 %v1275
    %v1361 = vpop.f32.mrf.mxu0
    %v1362 = vadd.f32 0.0, %v1361
    %v1363 = vpop.f32.mrf.mxu0
    %1364 = vdwg.mxu0
    %s1365 = scalar_lea.vmem %s4, 4
    %v1366 = vld [vmem:[%s1365] sm:$0x1]
    %v1367 = vld [vmem:[%s1365 + $0x1] sm:$0x1]
    %v1368 = vld [vmem:[%s1365 + $0x2] sm:$0x1]
    %v1369 = vld [vmem:[%s1365 + $0x3] sm:$0x1]
    %v1374 = vperm.slane %v1366, 0
    %v1375 = vperm.slane %v1367, 0
    %v1376 = vperm.slane %v1368, 0
    %v1377 = vperm.slane %v1369, 0
    %v1382 = vadd.f32 %v1287, %v1374
    %v1383 = vadd.f32 %v1312, %v1375
    %v1384 = vadd.f32 %v1337, %v1376
    %v1385 = vadd.f32 %v1362, %v1377
    %v1386 = vpack.c.bf16 %v1382, %v1382
    %v1387 = vpack.c.bf16 %v1383, %v1383
    %v1388 = vpack.c.bf16 %v1384, %v1384
    %v1389 = vpack.c.bf16 %v1385, %v1385
    %v1390 = vpack.c.bf16 %v1287, %v1287
    %v1391 = vpack.c.bf16 %v1312, %v1312
    %v1392 = vpack.c.bf16 %v1337, %v1337
    %v1393 = vpack.c.bf16 %v1362, %v1362
    %v1395 = vunpack.c.l.b16 %v1390
    %v1396 = vpack.c.b16 %v1395, %v1395
    %1397 = vrot.lane.b32.xlu0 %v1396, 120
    %v1398 = vpop.permute.xlu0 %1397
    %v1400 = vsel %vm323, %v1386, 0
    %v1403 = vsel %vm323, %v1398, 0
    %1405 = vmatpush.bf16.xpose.msra.mxu0 0
    %1406 = vmatpush.bf16.xpose.msra.mxu0 0
    %1407 = vmatpush.bf16.xpose.msra.mxu0 0
    %1408 = vmatpush.bf16.xpose.msra.mxu0 0
    %1409 = vmatpush.bf16.xpose.msra.mxu0 0
    %1410 = vmatpush.bf16.xpose.msra.mxu0 0
    %1411 = vmatpush.bf16.xpose.msra.mxu0 0
    %1412 = vmatpush.bf16.xpose.msra.mxu0 %v1403
    %1413 = vmatmul.bf16.gmra.mxu0 %v1400
    %v1414 = vpop.f32.mrf.mxu0
    %v1415 = vadd.f32 0.0, %v1414
    %v1416 = vpop.f32.mrf.mxu0
    %1417 = vdwg.mxu0
    %v1419 = vunpack.c.l.b16 %v1391
    %v1420 = vpack.c.b16 %v1419, %v1419
    %1421 = vrot.lane.b32.xlu0 %v1420, 120
    %v1422 = vpop.permute.xlu0 %1421
    %v1424 = vsel %vm323, %v1387, 0
    %v1427 = vsel %vm323, %v1422, 0
    %1429 = vmatpush.bf16.xpose.msra.mxu0 0
    %1430 = vmatpush.bf16.xpose.msra.mxu0 0
    %1431 = vmatpush.bf16.xpose.msra.mxu0 0
    %1432 = vmatpush.bf16.xpose.msra.mxu0 0
    %1433 = vmatpush.bf16.xpose.msra.mxu0 0
    %1434 = vmatpush.bf16.xpose.msra.mxu0 0
    %1435 = vmatpush.bf16.xpose.msra.mxu0 0
    %1436 = vmatpush.bf16.xpose.msra.mxu0 %v1427
    %1437 = vmatmul.bf16.gmra.mxu0 %v1424
    %v1438 = vpop.f32.mrf.mxu0
    %v1439 = vadd.f32 0.0, %v1438
    %v1440 = vpop.f32.mrf.mxu0
    %1441 = vdwg.mxu0
    %v1443 = vunpack.c.l.b16 %v1392
    %v1444 = vpack.c.b16 %v1443, %v1443
    %1445 = vrot.lane.b32.xlu0 %v1444, 120
    %v1446 = vpop.permute.xlu0 %1445
    %v1448 = vsel %vm323, %v1388, 0
    %v1451 = vsel %vm323, %v1446, 0
    %1453 = vmatpush.bf16.xpose.msra.mxu0 0
    %1454 = vmatpush.bf16.xpose.msra.mxu0 0
    %1455 = vmatpush.bf16.xpose.msra.mxu0 0
    %1456 = vmatpush.bf16.xpose.msra.mxu0 0
    %1457 = vmatpush.bf16.xpose.msra.mxu0 0
    %1458 = vmatpush.bf16.xpose.msra.mxu0 0
    %1459 = vmatpush.bf16.xpose.msra.mxu0 0
    %1460 = vmatpush.bf16.xpose.msra.mxu0 %v1451
    %1461 = vmatmul.bf16.gmra.mxu0 %v1448
    %v1462 = vpop.f32.mrf.mxu0
    %v1463 = vadd.f32 0.0, %v1462
    %v1464 = vpop.f32.mrf.mxu0
    %1465 = vdwg.mxu0
    %v1467 = vunpack.c.l.b16 %v1393
    %v1468 = vpack.c.b16 %v1467, %v1467
    %1469 = vrot.lane.b32.xlu0 %v1468, 120
    %v1470 = vpop.permute.xlu0 %1469
    %v1472 = vsel %vm323, %v1389, 0
    %v1475 = vsel %vm323, %v1470, 0
    %1477 = vmatpush.bf16.xpose.msra.mxu0 0
    %1478 = vmatpush.bf16.xpose.msra.mxu0 0
    %1479 = vmatpush.bf16.xpose.msra.mxu0 0
    %1480 = vmatpush.bf16.xpose.msra.mxu0 0
    %1481 = vmatpush.bf16.xpose.msra.mxu0 0
    %1482 = vmatpush.bf16.xpose.msra.mxu0 0
    %1483 = vmatpush.bf16.xpose.msra.mxu0 0
    %1484 = vmatpush.bf16.xpose.msra.mxu0 %v1475
    %1485 = vmatmul.bf16.gmra.mxu0 %v1472
    %v1486 = vpop.f32.mrf.mxu0
    %v1487 = vadd.f32 0.0, %v1486
    %v1488 = vpop.f32.mrf.mxu0
    %1489 = vdwg.mxu0
    %v1490 = vmul.f32 %v1415, 0.35355338
    %v1491 = vmul.f32 %v1439, 0.35355338
    %v1492 = vmul.f32 %v1463, 0.35355338
    %v1493 = vmul.f32 %v1487, 0.35355338
    %v1494 = vsel %vm323, %v1490, -inf
    %1495 = vmax.xlane.f32.xlu0 %v1494
    %v1496 = vpop.xlane.xlu0 %1495
    %v1497 = vsel %vm323, %v1491, -inf
    %1498 = vmax.xlane.f32.xlu0 %v1497
    %v1499 = vpop.xlane.xlu0 %1498
    %v1500 = vsel %vm323, %v1492, -inf
    %1501 = vmax.xlane.f32.xlu0 %v1500
    %v1502 = vpop.xlane.xlu0 %1501
    %v1503 = vsel %vm323, %v1493, -inf
    %1504 = vmax.xlane.f32.xlu0 %v1503
    %v1505 = vpop.xlane.xlu0 %1504
    %v1506 = vsub.f32 %v1490, %v1496
    %v1507 = vsub.f32 %v1491, %v1499
    %v1508 = vsub.f32 %v1492, %v1502
    %v1509 = vsub.f32 %v1493, %v1505
    %v1510 = vmul.f32 %v1506, 1.442695
    %v1511 = vpow.pop %v1510
    %v1512 = vmul.f32 %v1507, 1.442695
    %v1513 = vpow.pop %v1512
    %v1514 = vmul.f32 %v1508, 1.442695
    %v1515 = vpow.pop %v1514
    %v1516 = vmul.f32 %v1509, 1.442695
    %v1517 = vpow.pop %v1516
    %v1518 = vsel %vm323, %v1511, 0.0
    %1519 = vadd.xlane.f32.xlu0 %v1518
    %v1520 = vpop.xlane.xlu0 %1519
    %v1521 = vsel %vm323, %v1513, 0.0
    %1522 = vadd.xlane.f32.xlu0 %v1521
    %v1523 = vpop.xlane.xlu0 %1522
    %v1524 = vsel %vm323, %v1515, 0.0
    %1525 = vadd.xlane.f32.xlu0 %v1524
    %v1526 = vpop.xlane.xlu0 %1525
    %v1527 = vsel %vm323, %v1517, 0.0
    %1528 = vadd.xlane.f32.xlu0 %v1527
    %v1529 = vpop.xlane.xlu0 %1528
    %v1530 = vrcp.pop %v1520
    %v1531 = vrcp.pop %v1523
    %v1532 = vrcp.pop %v1526
    %v1533 = vrcp.pop %v1529
    %v1534 = vmul.f32 %v1511, %v1530
    %v1535 = vmul.f32 %v1513, %v1531
    %v1536 = vmul.f32 %v1515, %v1532
    %v1537 = vmul.f32 %v1517, %v1533
    %v1538 = vpack.c.bf16 %v1534, %v1534
    %v1539 = vpack.c.bf16 %v1535, %v1535
    %v1540 = vpack.c.bf16 %v1536, %v1536
    %v1541 = vpack.c.bf16 %v1537, %v1537
    %1542 = vrot.lane.b32.xlu0 %v1396, 112
    %v1543 = vpop.permute.xlu0 %1542
    %v1545 = vsel %vm323, %v1538, 0
    %v1548 = vsel %vm472, %v1543, 0
    %1550 = vmatpush.bf16.msra.mxu0 0
    %1551 = vmatpush.bf16.msra.mxu0 0
    %1552 = vmatpush.bf16.msra.mxu0 0
    %1553 = vmatpush.bf16.msra.mxu0 0
    %1554 = vmatpush.bf16.msra.mxu0 0
    %1555 = vmatpush.bf16.msra.mxu0 0
    %1556 = vmatpush.bf16.msra.mxu0 0
    %1557 = vmatpush.bf16.msra.mxu0 %v1548
    %1558 = vmatmul.bf16.gmra.mxu0 %v1545
    %v1559 = vpop.f32.mrf.mxu0
    %v1560 = vadd.f32 0.0, %v1559
    %v1561 = vpop.f32.mrf.mxu0
    %1562 = vdwg.mxu0
    %1563 = vrot.lane.b32.xlu0 %v1420, 112
    %v1564 = vpop.permute.xlu0 %1563
    %v1566 = vsel %vm323, %v1539, 0
    %v1569 = vsel %vm472, %v1564, 0
    %1571 = vmatpush.bf16.msra.mxu0 0
    %1572 = vmatpush.bf16.msra.mxu0 0
    %1573 = vmatpush.bf16.msra.mxu0 0
    %1574 = vmatpush.bf16.msra.mxu0 0
    %1575 = vmatpush.bf16.msra.mxu0 0
    %1576 = vmatpush.bf16.msra.mxu0 0
    %1577 = vmatpush.bf16.msra.mxu0 0
    %1578 = vmatpush.bf16.msra.mxu0 %v1569
    %1579 = vmatmul.bf16.gmra.mxu0 %v1566
    %v1580 = vpop.f32.mrf.mxu0
    %v1581 = vadd.f32 0.0, %v1580
    %v1582 = vpop.f32.mrf.mxu0
    %1583 = vdwg.mxu0
    %1584 = vrot.lane.b32.xlu0 %v1444, 112
    %v1585 = vpop.permute.xlu0 %1584
    %v1587 = vsel %vm323, %v1540, 0
    %v1590 = vsel %vm472, %v1585, 0
    %1592 = vmatpush.bf16.msra.mxu0 0
    %1593 = vmatpush.bf16.msra.mxu0 0
    %1594 = vmatpush.bf16.msra.mxu0 0
    %1595 = vmatpush.bf16.msra.mxu0 0
    %1596 = vmatpush.bf16.msra.mxu0 0
    %1597 = vmatpush.bf16.msra.mxu0 0
    %1598 = vmatpush.bf16.msra.mxu0 0
    %1599 = vmatpush.bf16.msra.mxu0 %v1590
    %1600 = vmatmul.bf16.gmra.mxu0 %v1587
    %v1601 = vpop.f32.mrf.mxu0
    %v1602 = vadd.f32 0.0, %v1601
    %v1603 = vpop.f32.mrf.mxu0
    %1604 = vdwg.mxu0
    %1605 = vrot.lane.b32.xlu0 %v1468, 112
    %v1606 = vpop.permute.xlu0 %1605
    %v1608 = vsel %vm323, %v1541, 0
    %v1611 = vsel %vm472, %v1606, 0
    %1613 = vmatpush.bf16.msra.mxu0 0
    %1614 = vmatpush.bf16.msra.mxu0 0
    %1615 = vmatpush.bf16.msra.mxu0 0
    %1616 = vmatpush.bf16.msra.mxu0 0
    %1617 = vmatpush.bf16.msra.mxu0 0
    %1618 = vmatpush.bf16.msra.mxu0 0
    %1619 = vmatpush.bf16.msra.mxu0 0
    %1620 = vmatpush.bf16.msra.mxu0 %v1611
    %1621 = vmatmul.bf16.gmra.mxu0 %v1608
    %v1622 = vpop.f32.mrf.mxu0
    %v1623 = vadd.f32 0.0, %v1622
    %v1624 = vpop.f32.mrf.mxu0
    %1625 = vdwg.mxu0
    %v1626 = vpack.c.bf16 %v1560, %v1560
    %v1627 = vpack.c.bf16 %v1581, %v1581
    %v1628 = vpack.c.bf16 %v1602, %v1602
    %v1629 = vpack.c.bf16 %v1623, %v1623
    %s1630 = scalar_lea.vmem %s5, 16
    %v1631 = vld [vmem:[%s1630] sm:$0xf]
    %v1632 = vld [vmem:[%s1630 + $0x4] sm:$0xf]
    %v1633 = vld [vmem:[%s1630 + $0x8] sm:$0xf]
    %v1634 = vld [vmem:[%s1630 + $0xc] sm:$0xf]
    %v1636 = vsel %vm323, %v1626, 0
    %v1639 = vsel %vm472, %v1631, 0
    %1641 = vmatpush.bf16.msra.mxu0 0
    %1642 = vmatpush.bf16.msra.mxu0 0
    %1643 = vmatpush.bf16.msra.mxu0 0
    %1644 = vmatpush.bf16.msra.mxu0 0
    %1645 = vmatpush.bf16.msra.mxu0 0
    %1646 = vmatpush.bf16.msra.mxu0 0
    %1647 = vmatpush.bf16.msra.mxu0 0
    %1648 = vmatpush.bf16.msra.mxu0 %v1639
    %1649 = vmatmul.bf16.gmra.mxu0 %v1636
    %v1650 = vpop.f32.mrf.mxu0
    %v1651 = vadd.f32 0.0, %v1650
    %v1652 = vpop.f32.mrf.mxu0
    %1653 = vdwg.mxu0
    %v1655 = vsel %vm323, %v1627, 0
    %v1658 = vsel %vm472, %v1632, 0
    %1660 = vmatpush.bf16.msra.mxu0 0
    %1661 = vmatpush.bf16.msra.mxu0 0
    %1662 = vmatpush.bf16.msra.mxu0 0
    %1663 = vmatpush.bf16.msra.mxu0 0
    %1664 = vmatpush.bf16.msra.mxu0 0
    %1665 = vmatpush.bf16.msra.mxu0 0
    %1666 = vmatpush.bf16.msra.mxu0 0
    %1667 = vmatpush.bf16.msra.mxu0 %v1658
    %1668 = vmatmul.bf16.gmra.mxu0 %v1655
    %v1669 = vpop.f32.mrf.mxu0
    %v1670 = vadd.f32 0.0, %v1669
    %v1671 = vpop.f32.mrf.mxu0
    %1672 = vdwg.mxu0
    %v1674 = vsel %vm323, %v1628, 0
    %v1677 = vsel %vm472, %v1633, 0
    %1679 = vmatpush.bf16.msra.mxu0 0
    %1680 = vmatpush.bf16.msra.mxu0 0
    %1681 = vmatpush.bf16.msra.mxu0 0
    %1682 = vmatpush.bf16.msra.mxu0 0
    %1683 = vmatpush.bf16.msra.mxu0 0
    %1684 = vmatpush.bf16.msra.mxu0 0
    %1685 = vmatpush.bf16.msra.mxu0 0
    %1686 = vmatpush.bf16.msra.mxu0 %v1677
    %1687 = vmatmul.bf16.gmra.mxu0 %v1674
    %v1688 = vpop.f32.mrf.mxu0
    %v1689 = vadd.f32 0.0, %v1688
    %v1690 = vpop.f32.mrf.mxu0
    %1691 = vdwg.mxu0
    %v1693 = vsel %vm323, %v1629, 0
    %v1696 = vsel %vm472, %v1634, 0
    %1698 = vmatpush.bf16.msra.mxu0 0
    %1699 = vmatpush.bf16.msra.mxu0 0
    %1700 = vmatpush.bf16.msra.mxu0 0
    %1701 = vmatpush.bf16.msra.mxu0 0
    %1702 = vmatpush.bf16.msra.mxu0 0
    %1703 = vmatpush.bf16.msra.mxu0 0
    %1704 = vmatpush.bf16.msra.mxu0 0
    %1705 = vmatpush.bf16.msra.mxu0 %v1696
    %1706 = vmatmul.bf16.gmra.mxu0 %v1693
    %v1707 = vpop.f32.mrf.mxu0
    %v1708 = vadd.f32 0.0, %v1707
    %v1709 = vpop.f32.mrf.mxu0
    %1710 = vdwg.mxu0
    %v1711 = vsel %vm107, %v1651, 0.0
    %v1712 = vsel %vm107, %v1670, 0.0
    %v1713 = vadd.f32 %v1711, %v1712
    %v1714 = vsel %vm107, %v1689, 0.0
    %v1715 = vadd.f32 %v1713, %v1714
    %v1716 = vsel %vm107, %v1708, 0.0
    %v1717 = vadd.f32 %v1715, %v1716
    %v1719 = vsel %vm107, %v1244, 0
    %1721 = vmatpush.bf16.msra.mxu0 0
    %1722 = vmatpush.bf16.msra.mxu0 0
    %1723 = vmatpush.bf16.msra.mxu0 0
    %1724 = vmatpush.bf16.msra.mxu0 0
    %1725 = vmatpush.bf16.msra.mxu0 0
    %1726 = vmatpush.bf16.msra.mxu0 0
    %1727 = vmatpush.bf16.msra.mxu0 %v1271
    %1728 = vmatpush.bf16.msra.mxu0 %v1270
    %1729 = vmatmul.bf16.gmra.mxu0 %v1719
    %v1730 = vpop.f32.mrf.mxu0
    %v1731 = vadd.f32 0.0, %v1730
    %v1732 = vpop.f32.mrf.mxu0
    %1733 = vdwg.mxu0
    %1734 = vmatpush.bf16.msra.mxu0 0
    %1735 = vmatpush.bf16.msra.mxu0 0
    %1736 = vmatpush.bf16.msra.mxu0 0
    %1737 = vmatpush.bf16.msra.mxu0 0
    %1738 = vmatpush.bf16.msra.mxu0 0
    %1739 = vmatpush.bf16.msra.mxu0 0
    %1740 = vmatpush.bf16.msra.mxu0 %v1299
    %1741 = vmatpush.bf16.msra.mxu0 %v1298
    %1742 = vmatmul.bf16.gmra.mxu0 %v1719
    %v1743 = vpop.f32.mrf.mxu0
    %v1744 = vadd.f32 0.0, %v1743
    %v1745 = vpop.f32.mrf.mxu0
    %1746 = vdwg.mxu0
    %1747 = vmatpush.bf16.msra.mxu0 0
    %1748 = vmatpush.bf16.msra.mxu0 0
    %1749 = vmatpush.bf16.msra.mxu0 0
    %1750 = vmatpush.bf16.msra.mxu0 0
    %1751 = vmatpush.bf16.msra.mxu0 0
    %1752 = vmatpush.bf16.msra.mxu0 0
    %1753 = vmatpush.bf16.msra.mxu0 %v1324
    %1754 = vmatpush.bf16.msra.mxu0 %v1323
    %1755 = vmatmul.bf16.gmra.mxu0 %v1719
    %v1756 = vpop.f32.mrf.mxu0
    %v1757 = vadd.f32 0.0, %v1756
    %v1758 = vpop.f32.mrf.mxu0
    %1759 = vdwg.mxu0
    %1760 = vmatpush.bf16.msra.mxu0 0
    %1761 = vmatpush.bf16.msra.mxu0 0
    %1762 = vmatpush.bf16.msra.mxu0 0
    %1763 = vmatpush.bf16.msra.mxu0 0
    %1764 = vmatpush.bf16.msra.mxu0 0
    %1765 = vmatpush.bf16.msra.mxu0 0
    %1766 = vmatpush.bf16.msra.mxu0 %v1349
    %1767 = vmatpush.bf16.msra.mxu0 %v1348
    %1768 = vmatmul.bf16.gmra.mxu0 %v1719
    %v1769 = vpop.f32.mrf.mxu0
    %v1770 = vadd.f32 0.0, %v1769
    %v1771 = vpop.f32.mrf.mxu0
    %1772 = vdwg.mxu0
    %v1773 = vadd.f32 %v1731, %v1374
    %v1774 = vadd.f32 %v1744, %v1375
    %v1775 = vadd.f32 %v1757, %v1376
    %v1776 = vadd.f32 %v1770, %v1377
    %v1777 = vpack.c.bf16 %v1773, %v1773
    %v1778 = vpack.c.bf16 %v1774, %v1774
    %v1779 = vpack.c.bf16 %v1775, %v1775
    %v1780 = vpack.c.bf16 %v1776, %v1776
    %v1781 = vpack.c.bf16 %v1731, %v1731
    %v1782 = vpack.c.bf16 %v1744, %v1744
    %v1783 = vpack.c.bf16 %v1757, %v1757
    %v1784 = vpack.c.bf16 %v1770, %v1770
    %v1786 = vunpack.c.l.b16 %v1781
    %v1787 = vpack.c.b16 %v1786, %v1786
    %1788 = vrot.lane.b32.xlu0 %v1787, 120
    %v1789 = vpop.permute.xlu0 %1788
    %v1791 = vsel %vm323, %v1777, 0
    %v1794 = vsel %vm323, %v1789, 0
    %1796 = vmatpush.bf16.xpose.msra.mxu0 0
    %1797 = vmatpush.bf16.xpose.msra.mxu0 0
    %1798 = vmatpush.bf16.xpose.msra.mxu0 0
    %1799 = vmatpush.bf16.xpose.msra.mxu0 0
    %1800 = vmatpush.bf16.xpose.msra.mxu0 0
    %1801 = vmatpush.bf16.xpose.msra.mxu0 0
    %1802 = vmatpush.bf16.xpose.msra.mxu0 0
    %1803 = vmatpush.bf16.xpose.msra.mxu0 %v1794
    %1804 = vmatmul.bf16.gmra.mxu0 %v1791
    %v1805 = vpop.f32.mrf.mxu0
    %v1806 = vadd.f32 0.0, %v1805
    %v1807 = vpop.f32.mrf.mxu0
    %1808 = vdwg.mxu0
    %v1810 = vunpack.c.l.b16 %v1782
    %v1811 = vpack.c.b16 %v1810, %v1810
    %1812 = vrot.lane.b32.xlu0 %v1811, 120
    %v1813 = vpop.permute.xlu0 %1812
    %v1815 = vsel %vm323, %v1778, 0
    %v1818 = vsel %vm323, %v1813, 0
    %1820 = vmatpush.bf16.xpose.msra.mxu0 0
    %1821 = vmatpush.bf16.xpose.msra.mxu0 0
    %1822 = vmatpush.bf16.xpose.msra.mxu0 0
    %1823 = vmatpush.bf16.xpose.msra.mxu0 0
    %1824 = vmatpush.bf16.xpose.msra.mxu0 0
    %1825 = vmatpush.bf16.xpose.msra.mxu0 0
    %1826 = vmatpush.bf16.xpose.msra.mxu0 0
    %1827 = vmatpush.bf16.xpose.msra.mxu0 %v1818
    %1828 = vmatmul.bf16.gmra.mxu0 %v1815
    %v1829 = vpop.f32.mrf.mxu0
    %v1830 = vadd.f32 0.0, %v1829
    %v1831 = vpop.f32.mrf.mxu0
    %1832 = vdwg.mxu0
    %v1834 = vunpack.c.l.b16 %v1783
    %v1835 = vpack.c.b16 %v1834, %v1834
    %1836 = vrot.lane.b32.xlu0 %v1835, 120
    %v1837 = vpop.permute.xlu0 %1836
    %v1839 = vsel %vm323, %v1779, 0
    %v1842 = vsel %vm323, %v1837, 0
    %1844 = vmatpush.bf16.xpose.msra.mxu0 0
    %1845 = vmatpush.bf16.xpose.msra.mxu0 0
    %1846 = vmatpush.bf16.xpose.msra.mxu0 0
    %1847 = vmatpush.bf16.xpose.msra.mxu0 0
    %1848 = vmatpush.bf16.xpose.msra.mxu0 0
    %1849 = vmatpush.bf16.xpose.msra.mxu0 0
    %1850 = vmatpush.bf16.xpose.msra.mxu0 0
    %1851 = vmatpush.bf16.xpose.msra.mxu0 %v1842
    %1852 = vmatmul.bf16.gmra.mxu0 %v1839
    %v1853 = vpop.f32.mrf.mxu0
    %v1854 = vadd.f32 0.0, %v1853
    %v1855 = vpop.f32.mrf.mxu0
    %1856 = vdwg.mxu0
    %v1858 = vunpack.c.l.b16 %v1784
    %v1859 = vpack.c.b16 %v1858, %v1858
    %1860 = vrot.lane.b32.xlu0 %v1859, 120
    %v1861 = vpop.permute.xlu0 %1860
    %v1863 = vsel %vm323, %v1780, 0
    %v1866 = vsel %vm323, %v1861, 0
    %1868 = vmatpush.bf16.xpose.msra.mxu0 0
    %1869 = vmatpush.bf16.xpose.msra.mxu0 0
    %1870 = vmatpush.bf16.xpose.msra.mxu0 0
    %1871 = vmatpush.bf16.xpose.msra.mxu0 0
    %1872 = vmatpush.bf16.xpose.msra.mxu0 0
    %1873 = vmatpush.bf16.xpose.msra.mxu0 0
    %1874 = vmatpush.bf16.xpose.msra.mxu0 0
    %1875 = vmatpush.bf16.xpose.msra.mxu0 %v1866
    %1876 = vmatmul.bf16.gmra.mxu0 %v1863
    %v1877 = vpop.f32.mrf.mxu0
    %v1878 = vadd.f32 0.0, %v1877
    %v1879 = vpop.f32.mrf.mxu0
    %1880 = vdwg.mxu0
    %v1881 = vmul.f32 %v1806, 0.35355338
    %v1882 = vmul.f32 %v1830, 0.35355338
    %v1883 = vmul.f32 %v1854, 0.35355338
    %v1884 = vmul.f32 %v1878, 0.35355338
    %v1885 = vsel %vm323, %v1881, -inf
    %1886 = vmax.xlane.f32.xlu0 %v1885
    %v1887 = vpop.xlane.xlu0 %1886
    %v1888 = vsel %vm323, %v1882, -inf
    %1889 = vmax.xlane.f32.xlu0 %v1888
    %v1890 = vpop.xlane.xlu0 %1889
    %v1891 = vsel %vm323, %v1883, -inf
    %1892 = vmax.xlane.f32.xlu0 %v1891
    %v1893 = vpop.xlane.xlu0 %1892
    %v1894 = vsel %vm323, %v1884, -inf
    %1895 = vmax.xlane.f32.xlu0 %v1894
    %v1896 = vpop.xlane.xlu0 %1895
    %v1897 = vsub.f32 %v1881, %v1887
    %v1898 = vsub.f32 %v1882, %v1890
    %v1899 = vsub.f32 %v1883, %v1893
    %v1900 = vsub.f32 %v1884, %v1896
    %v1901 = vmul.f32 %v1897, 1.442695
    %v1902 = vpow.pop %v1901
    %v1903 = vmul.f32 %v1898, 1.442695
    %v1904 = vpow.pop %v1903
    %v1905 = vmul.f32 %v1899, 1.442695
    %v1906 = vpow.pop %v1905
    %v1907 = vmul.f32 %v1900, 1.442695
    %v1908 = vpow.pop %v1907
    %v1909 = vsel %vm323, %v1902, 0.0
    %1910 = vadd.xlane.f32.xlu0 %v1909
    %v1911 = vpop.xlane.xlu0 %1910
    %v1912 = vsel %vm323, %v1904, 0.0
    %1913 = vadd.xlane.f32.xlu0 %v1912
    %v1914 = vpop.xlane.xlu0 %1913
    %v1915 = vsel %vm323, %v1906, 0.0
    %1916 = vadd.xlane.f32.xlu0 %v1915
    %v1917 = vpop.xlane.xlu0 %1916
    %v1918 = vsel %vm323, %v1908, 0.0
    %1919 = vadd.xlane.f32.xlu0 %v1918
    %v1920 = vpop.xlane.xlu0 %1919
    %v1921 = vrcp.pop %v1911
    %v1922 = vrcp.pop %v1914
    %v1923 = vrcp.pop %v1917
    %v1924 = vrcp.pop %v1920
    %v1925 = vmul.f32 %v1902, %v1921
    %v1926 = vmul.f32 %v1904, %v1922
    %v1927 = vmul.f32 %v1906, %v1923
    %v1928 = vmul.f32 %v1908, %v1924
    %v1929 = vpack.c.bf16 %v1925, %v1925
    %v1930 = vpack.c.bf16 %v1926, %v1926
    %v1931 = vpack.c.bf16 %v1927, %v1927
    %v1932 = vpack.c.bf16 %v1928, %v1928
    %1933 = vrot.lane.b32.xlu0 %v1787, 112
    %v1934 = vpop.permute.xlu0 %1933
    %v1936 = vsel %vm323, %v1929, 0
    %v1939 = vsel %vm472, %v1934, 0
    %1941 = vmatpush.bf16.msra.mxu0 0
    %1942 = vmatpush.bf16.msra.mxu0 0
    %1943 = vmatpush.bf16.msra.mxu0 0
    %1944 = vmatpush.bf16.msra.mxu0 0
    %1945 = vmatpush.bf16.msra.mxu0 0
    %1946 = vmatpush.bf16.msra.mxu0 0
    %1947 = vmatpush.bf16.msra.mxu0 0
    %1948 = vmatpush.bf16.msra.mxu0 %v1939
    %1949 = vmatmul.bf16.gmra.mxu0 %v1936
    %v1950 = vpop.f32.mrf.mxu0
    %v1951 = vadd.f32 0.0, %v1950
    %v1952 = vpop.f32.mrf.mxu0
    %1953 = vdwg.mxu0
    %1954 = vrot.lane.b32.xlu0 %v1811, 112
    %v1955 = vpop.permute.xlu0 %1954
    %v1957 = vsel %vm323, %v1930, 0
    %v1960 = vsel %vm472, %v1955, 0
    %1962 = vmatpush.bf16.msra.mxu0 0
    %1963 = vmatpush.bf16.msra.mxu0 0
    %1964 = vmatpush.bf16.msra.mxu0 0
    %1965 = vmatpush.bf16.msra.mxu0 0
    %1966 = vmatpush.bf16.msra.mxu0 0
    %1967 = vmatpush.bf16.msra.mxu0 0
    %1968 = vmatpush.bf16.msra.mxu0 0
    %1969 = vmatpush.bf16.msra.mxu0 %v1960
    %1970 = vmatmul.bf16.gmra.mxu0 %v1957
    %v1971 = vpop.f32.mrf.mxu0
    %v1972 = vadd.f32 0.0, %v1971
    %v1973 = vpop.f32.mrf.mxu0
    %1974 = vdwg.mxu0
    %1975 = vrot.lane.b32.xlu0 %v1835, 112
    %v1976 = vpop.permute.xlu0 %1975
    %v1978 = vsel %vm323, %v1931, 0
    %v1981 = vsel %vm472, %v1976, 0
    %1983 = vmatpush.bf16.msra.mxu0 0
    %1984 = vmatpush.bf16.msra.mxu0 0
    %1985 = vmatpush.bf16.msra.mxu0 0
    %1986 = vmatpush.bf16.msra.mxu0 0
    %1987 = vmatpush.bf16.msra.mxu0 0
    %1988 = vmatpush.bf16.msra.mxu0 0
    %1989 = vmatpush.bf16.msra.mxu0 0
    %1990 = vmatpush.bf16.msra.mxu0 %v1981
    %1991 = vmatmul.bf16.gmra.mxu0 %v1978
    %v1992 = vpop.f32.mrf.mxu0
    %v1993 = vadd.f32 0.0, %v1992
    %v1994 = vpop.f32.mrf.mxu0
    %1995 = vdwg.mxu0
    %1996 = vrot.lane.b32.xlu0 %v1859, 112
    %v1997 = vpop.permute.xlu0 %1996
    %v1999 = vsel %vm323, %v1932, 0
    %v2002 = vsel %vm472, %v1997, 0
    %2004 = vmatpush.bf16.msra.mxu0 0
    %2005 = vmatpush.bf16.msra.mxu0 0
    %2006 = vmatpush.bf16.msra.mxu0 0
    %2007 = vmatpush.bf16.msra.mxu0 0
    %2008 = vmatpush.bf16.msra.mxu0 0
    %2009 = vmatpush.bf16.msra.mxu0 0
    %2010 = vmatpush.bf16.msra.mxu0 0
    %2011 = vmatpush.bf16.msra.mxu0 %v2002
    %2012 = vmatmul.bf16.gmra.mxu0 %v1999
    %v2013 = vpop.f32.mrf.mxu0
    %v2014 = vadd.f32 0.0, %v2013
    %v2015 = vpop.f32.mrf.mxu0
    %2016 = vdwg.mxu0
    %v2017 = vpack.c.bf16 %v1951, %v1951
    %v2018 = vpack.c.bf16 %v1972, %v1972
    %v2019 = vpack.c.bf16 %v1993, %v1993
    %v2020 = vpack.c.bf16 %v2014, %v2014
    %v2022 = vsel %vm323, %v2017, 0
    %2024 = vmatpush.bf16.msra.mxu0 0
    %2025 = vmatpush.bf16.msra.mxu0 0
    %2026 = vmatpush.bf16.msra.mxu0 0
    %2027 = vmatpush.bf16.msra.mxu0 0
    %2028 = vmatpush.bf16.msra.mxu0 0
    %2029 = vmatpush.bf16.msra.mxu0 0
    %2030 = vmatpush.bf16.msra.mxu0 0
    %2031 = vmatpush.bf16.msra.mxu0 %v1639
    %2032 = vmatmul.bf16.gmra.mxu0 %v2022
    %v2033 = vpop.f32.mrf.mxu0
    %v2034 = vadd.f32 0.0, %v2033
    %v2035 = vpop.f32.mrf.mxu0
    %2036 = vdwg.mxu0
    %v2038 = vsel %vm323, %v2018, 0
    %2040 = vmatpush.bf16.msra.mxu0 0
    %2041 = vmatpush.bf16.msra.mxu0 0
    %2042 = vmatpush.bf16.msra.mxu0 0
    %2043 = vmatpush.bf16.msra.mxu0 0
    %2044 = vmatpush.bf16.msra.mxu0 0
    %2045 = vmatpush.bf16.msra.mxu0 0
    %2046 = vmatpush.bf16.msra.mxu0 0
    %2047 = vmatpush.bf16.msra.mxu0 %v1658
    %2048 = vmatmul.bf16.gmra.mxu0 %v2038
    %v2049 = vpop.f32.mrf.mxu0
    %v2050 = vadd.f32 0.0, %v2049
    %v2051 = vpop.f32.mrf.mxu0
    %2052 = vdwg.mxu0
    %v2054 = vsel %vm323, %v2019, 0
    %2056 = vmatpush.bf16.msra.mxu0 0
    %2057 = vmatpush.bf16.msra.mxu0 0
    %2058 = vmatpush.bf16.msra.mxu0 0
    %2059 = vmatpush.bf16.msra.mxu0 0
    %2060 = vmatpush.bf16.msra.mxu0 0
    %2061 = vmatpush.bf16.msra.mxu0 0
    %2062 = vmatpush.bf16.msra.mxu0 0
    %2063 = vmatpush.bf16.msra.mxu0 %v1677
    %2064 = vmatmul.bf16.gmra.mxu0 %v2054
    %v2065 = vpop.f32.mrf.mxu0
    %v2066 = vadd.f32 0.0, %v2065
    %v2067 = vpop.f32.mrf.mxu0
    %2068 = vdwg.mxu0
    %v2070 = vsel %vm323, %v2020, 0
    %2072 = vmatpush.bf16.msra.mxu0 0
    %2073 = vmatpush.bf16.msra.mxu0 0
    %2074 = vmatpush.bf16.msra.mxu0 0
    %2075 = vmatpush.bf16.msra.mxu0 0
    %2076 = vmatpush.bf16.msra.mxu0 0
    %2077 = vmatpush.bf16.msra.mxu0 0
    %2078 = vmatpush.bf16.msra.mxu0 0
    %2079 = vmatpush.bf16.msra.mxu0 %v1696
    %2080 = vmatmul.bf16.gmra.mxu0 %v2070
    %v2081 = vpop.f32.mrf.mxu0
    %v2082 = vadd.f32 0.0, %v2081
    %v2083 = vpop.f32.mrf.mxu0
    %2084 = vdwg.mxu0
    %v2085 = vsel %vm107, %v2034, 0.0
    %v2086 = vsel %vm107, %v2050, 0.0
    %v2087 = vadd.f32 %v2085, %v2086
    %v2088 = vsel %vm107, %v2066, 0.0
    %v2089 = vadd.f32 %v2087, %v2088
    %v2090 = vsel %vm107, %v2082, 0.0
    %v2091 = vadd.f32 %v2089, %v2090
    %v2092 = vld [vmem:[%s9 + $0x9] sm:$0x1]
    %v2093 = vperm.slane %v2092, 0
    %v2094 = vadd.f32 %v1717, %v2093
    %v2095 = vadd.f32 %v2091, %v2093
    %v2096 = vadd.f32 %v1241, %v2094
    %v2097 = vadd.f32 %v1242, %v2095
    %v2098 = vld [vmem:[%s9 + $0xa] sm:$0x1]
    %v2099 = vld [vmem:[%s9 + $0xb] sm:$0x1]
    %v2100 = vsel %vm107, %v2096, 0.0
    %2101 = vadd.xlane.f32.xlu0 %v2100
    %v2102 = vpop.xlane.xlu0 %2101
    %v2103 = vsel %vm107, %v2097, 0.0
    %2104 = vadd.xlane.f32.xlu0 %v2103
    %v2105 = vpop.xlane.xlu0 %2104
    %v2106 = vmul.f32 %v2102, %v120
    %v2107 = vmul.f32 %v2105, %v120
    %v2108 = vmul.f32 %v2096, %v2096
    %v2109 = vmul.f32 %v2097, %v2097
    %v2110 = vsel %vm107, %v2108, 0.0
    %2111 = vadd.xlane.f32.xlu0 %v2110
    %v2112 = vpop.xlane.xlu0 %2111
    %v2113 = vsel %vm107, %v2109, 0.0
    %2114 = vadd.xlane.f32.xlu0 %v2113
    %v2115 = vpop.xlane.xlu0 %2114
    %v2116 = vmul.f32 %v2112, %v120
    %v2117 = vmul.f32 %v2115, %v120
    %v2118 = vmul.f32 %v2106, %v2106
    %v2119 = vmul.f32 %v2107, %v2107
    %v2120 = vsub.f32 %v2116, %v2118
    %v2121 = vsub.f32 %v2117, %v2119
    %v2122 = vsub.f32 %v2096, %v2106
    %v2123 = vsub.f32 %v2097, %v2107
    %v2124 = vadd.f32 %v2120, 1e-12
    %v2125 = vadd.f32 %v2121, 1e-12
    %v2126 = vrsqrt.pop %v2124
    %v2127 = vmul.f32 %v2126, %v2124
    %v2128 = vmul.f32 %v2127, %v2126
    %v2129 = vmul.f32 0.5, %v2128
    %v2130 = vsub.f32 1.5, %v2129
    %v2131 = vmul.f32 %v2126, %v2130
    %vm2132 = vweird.f32 %v2124
    %vm2133 = vweird.f32 %v2126
    %vm2134 = vmor %vm2132, %vm2133
    %v2135 = vsel %vm2134, %v2126, %v2131
    %v2136 = vrsqrt.pop %v2125
    %v2137 = vmul.f32 %v2136, %v2125
    %v2138 = vmul.f32 %v2137, %v2136
    %v2139 = vmul.f32 0.5, %v2138
    %v2140 = vsub.f32 1.5, %v2139
    %v2141 = vmul.f32 %v2136, %v2140
    %vm2142 = vweird.f32 %v2125
    %vm2143 = vweird.f32 %v2136
    %vm2144 = vmor %vm2142, %vm2143
    %v2145 = vsel %vm2144, %v2136, %v2141
    %v2146 = vmul.f32 %v2122, %v2135
    %v2147 = vmul.f32 %v2123, %v2145
    %v2148 = vperm.slane %v2098, 0
    %v2149 = vmul.f32 %v2146, %v2148
    %v2150 = vmul.f32 %v2147, %v2148
    %v2151 = vperm.slane %v2099, 0
    %v2152 = vadd.f32 %v2149, %v2151
    %v2153 = vadd.f32 %v2150, %v2151
    %v2154 = vpack.c.bf16 %v2153, %v2152
    %s2155 = scalar_lea.vmem %s6, 16
    %v2156 = vld [vmem:[%s2155] sm:$0xf]
    %v2157 = vld [vmem:[%s2155 + $0x4] sm:$0xf]
    %v2158 = vld [vmem:[%s2155 + $0x8] sm:$0xf]
    %v2159 = vld [vmem:[%s2155 + $0xc] sm:$0xf]
    %v2160 = vld [vmem:[%s9 + $0xc] sm:$0x1]
    %v2161 = vperm.slane %v2160, 0
    %v2166 = vunpack.c.l.b16 %v2156
    %v2167 = vunpack.c.l.b16 %v2157
    %v2168 = vunpack.c.l.b16 %v2158
    %v2169 = vunpack.c.l.b16 %v2159
    %v2170 = vpack.c.b16 %v2167, %v2166
    %v2171 = vpack.c.b16 %v2169, %v2168
    %v2175 = vsel %vm107, %v2154, 0
    %2177 = vmatpush.bf16.msra.mxu0 0
    %2178 = vmatpush.bf16.msra.mxu0 0
    %2179 = vmatpush.bf16.msra.mxu0 0
    %2180 = vmatpush.bf16.msra.mxu0 0
    %2181 = vmatpush.bf16.msra.mxu0 0
    %2182 = vmatpush.bf16.msra.mxu0 0
    %2183 = vmatpush.bf16.msra.mxu0 %v2171
    %2184 = vmatpush.bf16.msra.mxu0 %v2170
    %2185 = vmatmul.bf16.gmra.mxu0 %v2175
    %v2186 = vpop.f32.mrf.mxu0
    %v2187 = vadd.f32 %v2161, %v2186
    %v2188 = vpop.f32.mrf.mxu0
    %v2189 = vadd.f32 %v2161, %v2188
    %2190 = vdwg.mxu0
    %v2191 = vmul.f32 %v2187, %v2187
    %v2192 = vmul.f32 %v2189, %v2189
    %v2193 = vmul.f32 %v2187, %v2191
    %v2194 = vmul.f32 %v2189, %v2192
    %v2195 = vmul.f32 %v2193, 0.044715
    %v2196 = vmul.f32 %v2194, 0.044715
    %v2197 = vadd.f32 %v2187, %v2195
    %v2198 = vadd.f32 %v2189, %v2196
    %v2199 = vmul.f32 %v2197, 0.7978846
    %v2200 = vmul.f32 %v2198, 0.7978846
    %v2201 = vtanh.pop %v2199
    %v2202 = vtanh.pop %v2200
    %v2203 = vadd.f32 %v2201, 1.0
    %v2204 = vadd.f32 %v2202, 1.0
    %v2205 = vmul.f32 %v2203, 0.5
    %v2206 = vmul.f32 %v2204, 0.5
    %v2207 = vmul.f32 %v2187, %v2205
    %v2208 = vmul.f32 %v2189, %v2206
    %v2209 = vpack.c.bf16 %v2208, %v2207
    %s2210 = scalar_lea.vmem %s7, 32
    %v2211 = vld [vmem:[%s2210] sm:$0xf]
    %v2212 = vld [vmem:[%s2210 + $0x4] sm:$0xf]
    %v2213 = vld [vmem:[%s2210 + $0x8] sm:$0xf]
    %v2214 = vld [vmem:[%s2210 + $0xc] sm:$0xf]
    %v2215 = vld [vmem:[%s2210 + $0x10] sm:$0xf]
    %v2216 = vld [vmem:[%s2210 + $0x14] sm:$0xf]
    %v2217 = vld [vmem:[%s2210 + $0x18] sm:$0xf]
    %v2218 = vld [vmem:[%s2210 + $0x1c] sm:$0xf]
    %v2219 = vld [vmem:[%s9 + $0xd] sm:$0x1]
    %v2220 = vperm.slane %v2219, 0
    %v2229 = vunpack.c.l.b16 %v2211
    %v2230 = vunpack.c.l.b16 %v2212
    %v2231 = vunpack.c.l.b16 %v2213
    %v2232 = vunpack.c.l.b16 %v2214
    %v2233 = vunpack.c.l.b16 %v2215
    %v2234 = vunpack.c.l.b16 %v2216
    %v2235 = vunpack.c.l.b16 %v2217
    %v2236 = vunpack.c.l.b16 %v2218
    %v2237 = vpack.c.b16 %v2230, %v2229
    %v2238 = vpack.c.b16 %v2232, %v2231
    %v2239 = vpack.c.b16 %v2234, %v2233
    %v2240 = vpack.c.b16 %v2236, %v2235
    %v2246 = vsel %vm87, %v2209, 0
    %2248 = vmatpush.bf16.msra.mxu0 0
    %2249 = vmatpush.bf16.msra.mxu0 0
    %2250 = vmatpush.bf16.msra.mxu0 0
    %2251 = vmatpush.bf16.msra.mxu0 0
    %2252 = vmatpush.bf16.msra.mxu0 %v2240
    %2253 = vmatpush.bf16.msra.mxu0 %v2239
    %2254 = vmatpush.bf16.msra.mxu0 %v2238
    %2255 = vmatpush.bf16.msra.mxu0 %v2237
    %2256 = vmatmul.bf16.gmra.mxu0 %v2246
    %v2257 = vpop.f32.mrf.mxu0
    %v2258 = vadd.f32 %v2220, %v2257
    %v2259 = vpop.f32.mrf.mxu0
    %v2260 = vadd.f32 %v2220, %v2259
    %2261 = vdwg.mxu0
    %v2262 = vadd.f32 %v2152, %v2258
    %v2263 = vadd.f32 %v2153, %v2260
    %v2264 = vld [vmem:[%s9 + $0xe] sm:$0x1]
    %v2265 = vld [vmem:[%s9 + $0xf] sm:$0x1]
    %v2266 = vsel %vm107, %v2262, 0.0
    %2267 = vadd.xlane.f32.xlu0 %v2266
    %v2268 = vpop.xlane.xlu0 %2267
    %v2269 = vsel %vm107, %v2263, 0.0
    %2270 = vadd.xlane.f32.xlu0 %v2269
    %v2271 = vpop.xlane.xlu0 %2270
    %v2272 = vmul.f32 %v2268, %v120
    %v2273 = vmul.f32 %v2271, %v120
    %v2274 = vmul.f32 %v2262, %v2262
    %v2275 = vmul.f32 %v2263, %v2263
    %v2276 = vsel %vm107, %v2274, 0.0
    %2277 = vadd.xlane.f32.xlu0 %v2276
    %v2278 = vpop.xlane.xlu0 %2277
    %v2279 = vsel %vm107, %v2275, 0.0
    %2280 = vadd.xlane.f32.xlu0 %v2279
    %v2281 = vpop.xlane.xlu0 %2280
    %v2282 = vmul.f32 %v2278, %v120
    %v2283 = vmul.f32 %v2281, %v120
    %v2284 = vmul.f32 %v2272, %v2272
    %v2285 = vmul.f32 %v2273, %v2273
    %v2286 = vsub.f32 %v2282, %v2284
    %v2287 = vsub.f32 %v2283, %v2285
    %v2288 = vsub.f32 %v2262, %v2272
    %v2289 = vsub.f32 %v2263, %v2273
    %v2290 = vadd.f32 %v2286, 1e-12
    %v2291 = vadd.f32 %v2287, 1e-12
    %v2292 = vrsqrt.pop %v2290
    %v2293 = vmul.f32 %v2292, %v2290
    %v2294 = vmul.f32 %v2293, %v2292
    %v2295 = vmul.f32 0.5, %v2294
    %v2296 = vsub.f32 1.5, %v2295
    %v2297 = vmul.f32 %v2292, %v2296
    %vm2298 = vweird.f32 %v2290
    %vm2299 = vweird.f32 %v2292
    %vm2300 = vmor %vm2298, %vm2299
    %v2301 = vsel %vm2300, %v2292, %v2297
    %v2302 = vrsqrt.pop %v2291
    %v2303 = vmul.f32 %v2302, %v2291
    %v2304 = vmul.f32 %v2303, %v2302
    %v2305 = vmul.f32 0.5, %v2304
    %v2306 = vsub.f32 1.5, %v2305
    %v2307 = vmul.f32 %v2302, %v2306
    %vm2308 = vweird.f32 %v2291
    %vm2309 = vweird.f32 %v2302
    %vm2310 = vmor %vm2308, %vm2309
    %v2311 = vsel %vm2310, %v2302, %v2307
    %v2312 = vmul.f32 %v2288, %v2301
    %v2313 = vmul.f32 %v2289, %v2311
    %v2314 = vperm.slane %v2264, 0
    %v2315 = vmul.f32 %v2312, %v2314
    %v2316 = vmul.f32 %v2313, %v2314
    %v2317 = vperm.slane %v2265, 0
    %v2318 = vadd.f32 %v2315, %v2317
    %v2319 = vadd.f32 %v2316, %v2317
    %v2320 = vpack.c.bf16 %v2319, %v2318
    %v2321 = vld [vmem:[%s8] sm:$0xf]
    %v2322 = vld [vmem:[%s8 + $0x4] sm:$0xf]
    %v2323 = vld [vmem:[%s8 + $0x8] sm:$0xf]
    %v2324 = vld [vmem:[%s8 + $0xc] sm:$0xf]
    %v2325 = vld [vmem:[%s9 + $0x10] sm:$0x1]
    %v2326 = vperm.slane %v2325, 0
    %v2331 = vunpack.c.l.b16 %v2321
    %v2332 = vunpack.c.l.b16 %v2322
    %v2333 = vunpack.c.l.b16 %v2323
    %v2334 = vunpack.c.l.b16 %v2324
    %v2335 = vpack.c.b16 %v2332, %v2331
    %v2336 = vpack.c.b16 %v2334, %v2333
    %v2340 = vsel %vm107, %v2320, 0
    %2342 = vmatpush.bf16.msra.mxu0 0
    %2343 = vmatpush.bf16.msra.mxu0 0
    %2344 = vmatpush.bf16.msra.mxu0 0
    %2345 = vmatpush.bf16.msra.mxu0 0
    %2346 = vmatpush.bf16.msra.mxu0 0
    %2347 = vmatpush.bf16.msra.mxu0 0
    %2348 = vmatpush.bf16.msra.mxu0 %v2336
    %2349 = vmatpush.bf16.msra.mxu0 %v2335
    %2350 = vmatmul.bf16.gmra.mxu0 %v2340
    %v2351 = vpop.f32.mrf.mxu0
    %v2352 = vadd.f32 %v2326, %v2351
    %v2353 = vpop.f32.mrf.mxu0
    %v2354 = vadd.f32 %v2326, %v2353
    %2355 = vdwg.mxu0
    %2356 = vst [vmem:[#allocation2] sm:$0xff] %v2352
    %2357 = vst [vmem:[#allocation2 + $0x8] sm:$0xff] %v2354
    // Predicated region
    $region42: #{tpu_custom_call.1} parent=1 // pred_check
      _
    $region43: #{tpu_custom_call.1} parent=1 // pred_check_branch
      %2359 = sbr.rel (0) target = $region45
    $region44: #{tpu_custom_call.1} parent=1 // pred_region
      %2361 = vsyncadd [#allocation3], 0
      %s2362 = sshll.u32 [#allocation2], 4
      %s2363 = int_to_ptr.vmem [resolvable:$true] %s2362
      %s2364 = sshll.u32 %s10, 4
      %s2365 = int_to_ptr.hbm [resolvable:$true] %s2364
      %2370 = dma.vmem_to_hbm [thread:$0]  %s2363, 256, %s2365, [#allocation3], 128, 128, 8
    $region45: #{tpu_custom_call.1} parent=1 // pred_fallthru
      _
    // Predicated region
    $region46: #{tpu_custom_call.1} parent=1 // pred_check
      _
    $region47: #{tpu_custom_call.1} parent=1 // pred_check_branch
      %2372 = sbr.rel (0) target = $region49
    $region48: #{tpu_custom_call.1} parent=1 // pred_region
      %2374 = dma.done [#allocation3], 256
    $region49: #{tpu_custom_call.1} parent=1 // pred_fallthru
      _
    %2375 = vsyncpa [#allocation3], 1

</llo_original>
